<compile_context>
chip_gen: v5e
topology: v5e:2x2
jax: 0.10.0
libtpu: 0.0.40
codegen_flags: <defaults>
</compile_context>

<pallas_src>
import functools

import jax
import jax.numpy as jnp
import numpy as np
from jax.experimental import pallas as pl
from jax.experimental.pallas import tpu as pltpu

LN_EPS = 1e-5  # nn.LayerNorm default used by flash_attn Block


def _layer_norm(x, gamma, beta):
    mu = jnp.mean(x, axis=-1, keepdims=True)
    var = jnp.mean((x - mu) ** 2, axis=-1, keepdims=True)
    return (x - mu) * jax.lax.rsqrt(var + LN_EPS) * gamma + beta


def _gelu(x):
    # TODO(synk): flash_attn's Mlp uses exact (erf) GELU; the tanh approximation
    # is used here to guarantee Mosaic lowering (max abs deviation ~1e-3).
    return jax.nn.gelu(x, approximate=True)


def _stack_kernel(num_heads, head_dim,
                  x_ref, wqkv_ref, bqkv_ref, woh_ref, bo_ref,
                  g1_ref, b1_ref, w1_ref, bf1_ref, w2_ref, bf2_ref,
                  g2_ref, b2_ref, o_ref, h_ref):
    """One (batch element, layer) grid step of the transformer stack."""
    l = pl.program_id(1)

    # Layer 0: seed the VMEM-resident activation from the HBM input block.
    @pl.when(l == 0)
    def _():
        h_ref[...] = x_ref[0].astype(jnp.float32)

    x = h_ref[...]                                    # (S, D) f32 resident act
    S, D = x.shape
    H, hd = num_heads, head_dim
    scale = 1.0 / (hd ** 0.5)
    xb = x.astype(jnp.bfloat16)

    # --- fused QKV projection (bf16 MXU inputs, f32 accumulation) ------------
    qkv = jnp.dot(xb, wqkv_ref[0], preferred_element_type=jnp.float32)
    qkv = qkv + bqkv_ref[0]
    q = qkv[:, 0 * D:1 * D] * scale                   # softmax scale folded in
    k = qkv[:, 1 * D:2 * D]
    v = qkv[:, 2 * D:3 * D]

    # --- head-batched attention ----------------------------------------------
    # (S, D) -> (H, S, hd): static lane slices stacked on a new major axis.
    def to_heads(t):
        return jnp.stack([t[:, h * hd:(h + 1) * hd] for h in range(H)], axis=0)

    qh = to_heads(q).astype(jnp.bfloat16)             # (H, S, hd)
    kh = to_heads(k).astype(jnp.bfloat16)
    vh = to_heads(v).astype(jnp.bfloat16)

    # TODO(synk): for long sequences convert to online-softmax over KV tiles
    # (flash formulation with m/l/acc carries) so the (H, S, S) scores never
    # materialize; at these shapes a single tile covers all of S.
    s = jnp.einsum("hqd,hkd->hqk", qh, kh,
                   preferred_element_type=jnp.float32)        # (H, S, S) f32
    s = s - jnp.max(s, axis=-1, keepdims=True)
    p = jnp.exp(s)
    denom = jnp.sum(p, axis=-1, keepdims=True)
    p = p * pl.reciprocal(denom, approx=True)
    oh = jnp.einsum("hqk,hkd->hqd", p.astype(jnp.bfloat16), vh,
                    preferred_element_type=jnp.float32)       # (H, S, hd) f32

    # Output projection as a per-head accumulation (no lane-axis concat).
    attn = jnp.dot(oh[0].astype(jnp.bfloat16), woh_ref[0, 0],
                   preferred_element_type=jnp.float32)
    for h in range(1, H):
        attn = attn + jnp.dot(oh[h].astype(jnp.bfloat16), woh_ref[0, h],
                              preferred_element_type=jnp.float32)
    attn = attn + bo_ref[0]

    # --- residual + LayerNorm 1 (post-norm) -----------------------------------
    h1 = _layer_norm(attn + x, g1_ref[0], b1_ref[0])

    # --- MLP: fc1 -> GELU -> fc2 (bf16 matmuls, f32 elementwise) ---------------
    # TODO(synk): tile along seq for large S*dff so the GELU intermediate stays
    # bounded in VMEM.
    ff = jnp.dot(h1.astype(jnp.bfloat16), w1_ref[0],
                 preferred_element_type=jnp.float32) + bf1_ref[0]
    ff = _gelu(ff)
    y = jnp.dot(ff.astype(jnp.bfloat16), w2_ref[0],
                preferred_element_type=jnp.float32) + bf2_ref[0]

    # --- residual + LayerNorm 2 ------------------------------------------------
    out = _layer_norm(y + h1, g2_ref[0], b2_ref[0])

    h_ref[...] = out                                  # carry to next layer

    @pl.when(l == pl.num_programs(1) - 1)
    def _():
        o_ref[0] = out.astype(o_ref.dtype)


def transformer_forward(x, params, num_heads):
    """All flash_attn Blocks (post-norm) fused into a single pallas_call.

    Grid = (batch, layer); per-layer weights are stacked along a leading layer
    axis and streamed as bf16; the activation is carried across layers in VMEM.
    """
    # TODO(synk): only the src_key_padding_mask=None path is implemented; the
    # flash_attn unpad/pad varlen path is not translated.
    B, S, D = x.shape
    L = len(params)
    H = num_heads
    hd = D // H
    assert H * hd == D

    def stk(name, bf16=False):
        a = jnp.stack([p[name] for p in params], axis=0)
        return a.astype(jnp.bfloat16) if bf16 else a

    wqkv = stk("wqkv", True)                                   # (L, D, 3D) bf16
    bqkv = stk("bqkv")                                         # (L, 1, 3D) f32
    # out-proj weight re-laid out per head: rows ordered (h, d) -> (H, hd, D)
    woh = jnp.stack([p["wo"].reshape(H, hd, D) for p in params],
                    axis=0).astype(jnp.bfloat16)               # (L, H, hd, D)
    bo = stk("bo")                                             # (L, 1, D)
    g1, b1 = stk("g1"), stk("b1")
    w1 = stk("w1", True)                                       # (L, D, dff)
    bf1 = stk("bf1")                                           # (L, 1, dff)
    w2 = stk("w2", True)                                       # (L, dff, D)
    bf2 = stk("bf2")                                           # (L, 1, D)
    g2, b2 = stk("g2"), stk("b2")

    weight_arrays = [wqkv, bqkv, woh, bo, g1, b1, w1, bf1, w2, bf2, g2, b2]

    def wspec(arr):
        nd = arr.ndim
        blk = (1,) + arr.shape[1:]
        return pl.BlockSpec(blk, lambda b, l, _nd=nd: (l,) + (0,) * (_nd - 1))

    # TODO(synk): for small D, fold several batch elements per grid step to fill
    # sublanes/lanes; here the grid stays one batch element per step.
    in_specs = [pl.BlockSpec((1, S, D), lambda b, l: (b, 0, 0))] + \
               [wspec(a) for a in weight_arrays]
    out_spec = pl.BlockSpec((1, S, D), lambda b, l: (b, 0, 0))

    kernel = functools.partial(_stack_kernel, H, hd)

    return pl.pallas_call(
        kernel,
        out_shape=jax.ShapeDtypeStruct((B, S, D), x.dtype),
        grid_spec=pltpu.PrefetchScalarGridSpec(
            num_scalar_prefetch=0,
            grid=(B, L),
            in_specs=in_specs,
            out_specs=out_spec,
            scratch_shapes=[pltpu.VMEM((S, D), jnp.float32)],
        ),
        compiler_params=pltpu.CompilerParams(
            dimension_semantics=("parallel", "arbitrary"),
            vmem_limit_bytes=32 * 1024 * 1024,
        ),
    )(x, *weight_arrays)


def init_params(key, dim, dff, num_layers):
    params = []
    std = 0.02
    for _ in range(num_layers):
        key, *ks = jax.random.split(key, 7)
        params.append(dict(
            wqkv=jax.random.normal(ks[0], (dim, 3 * dim), jnp.float32) * std,
            bqkv=jnp.zeros((1, 3 * dim), jnp.float32),
            wo=jax.random.normal(ks[1], (dim, dim), jnp.float32) * std,
            bo=jnp.zeros((1, dim), jnp.float32),
            g1=jnp.ones((1, dim), jnp.float32),
            b1=jnp.zeros((1, dim), jnp.float32),
            w1=jax.random.normal(ks[2], (dim, dff), jnp.float32) * std,
            bf1=jax.random.normal(ks[3], (1, dff), jnp.float32) * std,
            w2=jax.random.normal(ks[4], (dff, dim), jnp.float32) * std,
            bf2=jax.random.normal(ks[5], (1, dim), jnp.float32) * std,
            g2=jnp.ones((1, dim), jnp.float32),
            b2=jnp.zeros((1, dim), jnp.float32),
        ))
    return params


def reference_forward(x, params, num_heads):
    """Pure-JAX (f32) reference of the same forward pass, for validation."""
    B, S, D = x.shape
    hd = D // num_heads
    scale = 1.0 / hd ** 0.5
    for p in params:
        qkv = x @ p["wqkv"] + p["bqkv"][0]
        q, k, v = jnp.split(qkv, 3, axis=-1)
        q = q.reshape(B, S, num_heads, hd)
        k = k.reshape(B, S, num_heads, hd)
        v = v.reshape(B, S, num_heads, hd)
        s = jnp.einsum("bqhd,bkhd->bhqk", q, k) * scale
        a = jax.nn.softmax(s, axis=-1)
        attn = jnp.einsum("bhqk,bkhd->bqhd", a, v).reshape(B, S, D)
        attn = attn @ p["wo"] + p["bo"][0]
        h1 = _layer_norm(attn + x, p["g1"][0], p["b1"][0])
        ff = _gelu(h1 @ p["w1"] + p["bf1"][0]) @ p["w2"] + p["bf2"][0]
        x = _layer_norm(ff + h1, p["g2"][0], p["b2"][0])
    return x


if __name__ == "__main__":
    # dim_model=32, num_heads=4 (head_dim=8), dim_feedforward=4*dim=128,
    # num_layers=2, batch=2, seq=8
    B, S, D = 2, 8, 32
    num_layers = 2
    num_heads = 4
    dff = 4 * D

    key = jax.random.PRNGKey(0)
    kx, kp = jax.random.split(key)
    x = jax.random.normal(kx, (B, S, D), jnp.float32)
    params = init_params(kp, D, dff, num_layers)

    out = transformer_forward(x, params, num_heads)
    out = jax.block_until_ready(out)

    ref = reference_forward(x, params, num_heads)
    # Kernel uses bf16 matmul inputs (f32 accumulation) + approx reciprocal, so
    # the tolerance vs the pure-f32 reference is slightly looser than before.
    np.testing.assert_allclose(np.asarray(out), np.asarray(ref),
                               rtol=3e-2, atol=3e-2)

    print("KERNEL_OK")
</pallas_src>

<mosaic_0001>
module attributes {stable_mosaic.version = 11 : i64} {
  func.func @_stack_kernel(%arg0: i32, %arg1: i32, %arg2: memref<1x8x32xf32, #tpu.memory_space<vmem>>, %arg3: memref<1x32x96xbf16, #tpu.memory_space<vmem>>, %arg4: memref<1x1x96xf32, #tpu.memory_space<vmem>>, %arg5: memref<1x4x8x32xbf16, #tpu.memory_space<vmem>>, %arg6: memref<1x1x32xf32, #tpu.memory_space<vmem>>, %arg7: memref<1x1x32xf32, #tpu.memory_space<vmem>>, %arg8: memref<1x1x32xf32, #tpu.memory_space<vmem>>, %arg9: memref<1x32x128xbf16, #tpu.memory_space<vmem>>, %arg10: memref<1x1x128xf32, #tpu.memory_space<vmem>>, %arg11: memref<1x128x32xbf16, #tpu.memory_space<vmem>>, %arg12: memref<1x1x32xf32, #tpu.memory_space<vmem>>, %arg13: memref<1x1x32xf32, #tpu.memory_space<vmem>>, %arg14: memref<1x1x32xf32, #tpu.memory_space<vmem>>, %arg15: memref<1x8x32xf32, #tpu.memory_space<vmem>>, %arg16: memref<8x32xf32, #tpu.memory_space<vmem>>) attributes {dimension_semantics = [#tpu.dimension_semantics<parallel>, #tpu.dimension_semantics<arbitrary>], iteration_bounds = array<i64: 2, 2>, scalar_prefetch = 0 : i64, scratch_operands = 1 : i64, tpu.core_type = #tpu.core_type<tc>, window_params = [{transform_indices = @transform_0, window_bounds = array<i64: 1, 8, 32>}, {transform_indices = @transform_1, window_bounds = array<i64: 1, 32, 96>}, {transform_indices = @transform_2, window_bounds = array<i64: 1, 1, 96>}, {transform_indices = @transform_3, window_bounds = array<i64: 1, 4, 8, 32>}, {transform_indices = @transform_4, window_bounds = array<i64: 1, 1, 32>}, {transform_indices = @transform_5, window_bounds = array<i64: 1, 1, 32>}, {transform_indices = @transform_6, window_bounds = array<i64: 1, 1, 32>}, {transform_indices = @transform_7, window_bounds = array<i64: 1, 32, 128>}, {transform_indices = @transform_8, window_bounds = array<i64: 1, 1, 128>}, {transform_indices = @transform_9, window_bounds = array<i64: 1, 128, 32>}, {transform_indices = @transform_10, window_bounds = array<i64: 1, 1, 32>}, {transform_indices = @transform_11, window_bounds = array<i64: 1, 1, 32>}, {transform_indices = @transform_12, window_bounds = array<i64: 1, 1, 32>}, {transform_indices = @transform_13, window_bounds = array<i64: 1, 8, 32>}]} {
    %c0_i32 = arith.constant 0 : i32
    %0 = arith.cmpi eq, %arg1, %c0_i32 : i32
    %1 = arith.extui %0 : i1 to i32
    %c0_i32_0 = arith.constant 0 : i32
    %2 = arith.cmpi ne, %1, %c0_i32_0 : i32
    scf.if %2 {
      %c0_76 = arith.constant 0 : index
      %c0_77 = arith.constant 0 : index
      %c0_78 = arith.constant 0 : index
      %178 = vector.load %arg2[%c0_76, %c0_77, %c0_78] : memref<1x8x32xf32, #tpu.memory_space<vmem>>, vector<1x8x32xf32>
      %179 = vector.shape_cast %178 : vector<1x8x32xf32> to vector<8x32xf32>
      %c0_79 = arith.constant 0 : index
      %c0_80 = arith.constant 0 : index
      %180 = vector.load %arg16[%c0_79, %c0_80] : memref<8x32xf32, #tpu.memory_space<vmem>>, vector<8x32xf32>
      tpu.vector_store %arg16[%c0_79, %c0_80], %179 {strides = array<i32>} : memref<8x32xf32, #tpu.memory_space<vmem>>, vector<8x32xf32>,
    } else {
    }
    %c0 = arith.constant 0 : index
    %c0_1 = arith.constant 0 : index
    %3 = vector.load %arg16[%c0, %c0_1] : memref<8x32xf32, #tpu.memory_space<vmem>>, vector<8x32xf32>
    %4 = arith.truncf %3 : vector<8x32xf32> to vector<8x32xbf16>
    %c0_2 = arith.constant 0 : index
    %c0_3 = arith.constant 0 : index
    %c0_4 = arith.constant 0 : index
    %5 = vector.load %arg3[%c0_2, %c0_3, %c0_4] : memref<1x32x96xbf16, #tpu.memory_space<vmem>>, vector<1x32x96xbf16>
    %6 = vector.shape_cast %5 : vector<1x32x96xbf16> to vector<32x96xbf16>
    %cst = arith.constant dense<0.000000e+00> : vector<8x96xf32>
    %7 = tpu.matmul %4, %6, %cst {dimension_numbers = #tpu.dot_dimension_numbers<[1], [0], [0], [1], [0, 0, 1, 1], [], []>} : vector<8x32xbf16>, vector<32x96xbf16>, vector<8x96xf32> -> vector<8x96xf32>
    %c0_5 = arith.constant 0 : index
    %c0_6 = arith.constant 0 : index
    %c0_7 = arith.constant 0 : index
    %8 = vector.load %arg4[%c0_5, %c0_6, %c0_7] : memref<1x1x96xf32, #tpu.memory_space<vmem>>, vector<1x1x96xf32>
    %9 = vector.shape_cast %8 : vector<1x1x96xf32> to vector<1x96xf32>
    %10 = vector.broadcast %9 : vector<1x96xf32> to vector<8x96xf32>
    %11 = arith.addf %7, %10 : vector<8x96xf32>
    %12 = vector.extract_strided_slice %11 {offsets = [0, 0], sizes = [8, 32], strides = [1, 1]} : vector<8x96xf32> to vector<8x32xf32>
    %cst_8 = arith.constant 0.353553385 : f32
    %13 = vector.broadcast %cst_8 : f32 to vector<8x32xf32>
    %14 = arith.mulf %12, %13 : vector<8x32xf32>
    %15 = vector.extract_strided_slice %11 {offsets = [0, 32], sizes = [8, 32], strides = [1, 1]} : vector<8x96xf32> to vector<8x32xf32>
    %16 = vector.extract_strided_slice %11 {offsets = [0, 64], sizes = [8, 32], strides = [1, 1]} : vector<8x96xf32> to vector<8x32xf32>
    %17 = vector.extract_strided_slice %14 {offsets = [0, 0], sizes = [8, 8], strides = [1, 1]} : vector<8x32xf32> to vector<8x8xf32>
    %18 = vector.extract_strided_slice %14 {offsets = [0, 8], sizes = [8, 8], strides = [1, 1]} : vector<8x32xf32> to vector<8x8xf32>
    %19 = vector.extract_strided_slice %14 {offsets = [0, 16], sizes = [8, 8], strides = [1, 1]} : vector<8x32xf32> to vector<8x8xf32>
    %20 = vector.extract_strided_slice %14 {offsets = [0, 24], sizes = [8, 8], strides = [1, 1]} : vector<8x32xf32> to vector<8x8xf32>
    %21 = vector.shape_cast %17 : vector<8x8xf32> to vector<1x8x8xf32>
    %22 = vector.shape_cast %18 : vector<8x8xf32> to vector<1x8x8xf32>
    %23 = vector.shape_cast %19 : vector<8x8xf32> to vector<1x8x8xf32>
    %24 = vector.shape_cast %20 : vector<8x8xf32> to vector<1x8x8xf32>
    %25 = tpu.concatenate %21, %22, %23, %24 in 0 : vector<1x8x8xf32>, vector<1x8x8xf32>, vector<1x8x8xf32>, vector<1x8x8xf32> -> vector<4x8x8xf32>
    %26 = arith.truncf %25 : vector<4x8x8xf32> to vector<4x8x8xbf16>
    %27 = vector.extract_strided_slice %15 {offsets = [0, 0], sizes = [8, 8], strides = [1, 1]} : vector<8x32xf32> to vector<8x8xf32>
    %28 = vector.extract_strided_slice %15 {offsets = [0, 8], sizes = [8, 8], strides = [1, 1]} : vector<8x32xf32> to vector<8x8xf32>
    %29 = vector.extract_strided_slice %15 {offsets = [0, 16], sizes = [8, 8], strides = [1, 1]} : vector<8x32xf32> to vector<8x8xf32>
    %30 = vector.extract_strided_slice %15 {offsets = [0, 24], sizes = [8, 8], strides = [1, 1]} : vector<8x32xf32> to vector<8x8xf32>
    %31 = vector.shape_cast %27 : vector<8x8xf32> to vector<1x8x8xf32>
    %32 = vector.shape_cast %28 : vector<8x8xf32> to vector<1x8x8xf32>
    %33 = vector.shape_cast %29 : vector<8x8xf32> to vector<1x8x8xf32>
    %34 = vector.shape_cast %30 : vector<8x8xf32> to vector<1x8x8xf32>
    %35 = tpu.concatenate %31, %32, %33, %34 in 0 : vector<1x8x8xf32>, vector<1x8x8xf32>, vector<1x8x8xf32>, vector<1x8x8xf32> -> vector<4x8x8xf32>
    %36 = arith.truncf %35 : vector<4x8x8xf32> to vector<4x8x8xbf16>
    %37 = vector.extract_strided_slice %16 {offsets = [0, 0], sizes = [8, 8], strides = [1, 1]} : vector<8x32xf32> to vector<8x8xf32>
    %38 = vector.extract_strided_slice %16 {offsets = [0, 8], sizes = [8, 8], strides = [1, 1]} : vector<8x32xf32> to vector<8x8xf32>
    %39 = vector.extract_strided_slice %16 {offsets = [0, 16], sizes = [8, 8], strides = [1, 1]} : vector<8x32xf32> to vector<8x8xf32>
    %40 = vector.extract_strided_slice %16 {offsets = [0, 24], sizes = [8, 8], strides = [1, 1]} : vector<8x32xf32> to vector<8x8xf32>
    %41 = vector.shape_cast %37 : vector<8x8xf32> to vector<1x8x8xf32>
    %42 = vector.shape_cast %38 : vector<8x8xf32> to vector<1x8x8xf32>
    %43 = vector.shape_cast %39 : vector<8x8xf32> to vector<1x8x8xf32>
    %44 = vector.shape_cast %40 : vector<8x8xf32> to vector<1x8x8xf32>
    %45 = tpu.concatenate %41, %42, %43, %44 in 0 : vector<1x8x8xf32>, vector<1x8x8xf32>, vector<1x8x8xf32>, vector<1x8x8xf32> -> vector<4x8x8xf32>
    %46 = arith.truncf %45 : vector<4x8x8xf32> to vector<4x8x8xbf16>
    "tpu.trace_start"() <{level = 10 : i32, message = "hqd,hkd->hqk"}> : () -> ()
    %cst_9 = arith.constant dense<0.000000e+00> : vector<4x8x8xf32>
    %47 = tpu.matmul %26, %36, %cst_9 {dimension_numbers = #tpu.dot_dimension_numbers<[2], [2], [1], [1], [0, 0, 0, 1, 1, 1], [0], [0]>} : vector<4x8x8xbf16>, vector<4x8x8xbf16>, vector<4x8x8xf32> -> vector<4x8x8xf32>
    "tpu.trace_stop"() : () -> ()
    %cst_10 = arith.constant dense<0xFF800000> : vector<4x8xf32>
    %48 = vector.multi_reduction <maximumf>, %47, %cst_10 [2] : vector<4x8x8xf32> to vector<4x8xf32>
    %49 = vector.shape_cast %48 : vector<4x8xf32> to vector<4x8x1xf32>
    %50 = vector.broadcast %49 : vector<4x8x1xf32> to vector<4x8x8xf32>
    %51 = arith.subf %47, %50 : vector<4x8x8xf32>
    %52 = math.exp %51 : vector<4x8x8xf32>
    %cst_11 = arith.constant dense<0.000000e+00> : vector<4x8xf32>
    %53 = vector.multi_reduction <add>, %52, %cst_11 [2] : vector<4x8x8xf32> to vector<4x8xf32>
    %54 = vector.shape_cast %53 : vector<4x8xf32> to vector<4x8x1xf32>
    %55 = tpu.reciprocal %54 {approx = true} : vector<4x8x1xf32> -> vector<4x8x1xf32>
    %56 = vector.broadcast %55 : vector<4x8x1xf32> to vector<4x8x8xf32>
    %57 = arith.mulf %52, %56 : vector<4x8x8xf32>
    %58 = arith.truncf %57 : vector<4x8x8xf32> to vector<4x8x8xbf16>
    "tpu.trace_start"() <{level = 10 : i32, message = "hqk,hkd->hqd"}> : () -> ()
    %cst_12 = arith.constant dense<0.000000e+00> : vector<4x8x8xf32>
    %59 = tpu.matmul %58, %46, %cst_12 {dimension_numbers = #tpu.dot_dimension_numbers<[2], [1], [1], [2], [0, 0, 0, 1, 1, 2], [0], [0]>} : vector<4x8x8xbf16>, vector<4x8x8xbf16>, vector<4x8x8xf32> -> vector<4x8x8xf32>
    "tpu.trace_stop"() : () -> ()
    %60 = vector.extract_strided_slice %59 {offsets = [0, 0, 0], sizes = [1, 8, 8], strides = [1, 1, 1]} : vector<4x8x8xf32> to vector<1x8x8xf32>
    %61 = vector.shape_cast %60 : vector<1x8x8xf32> to vector<8x8xf32>
    %62 = arith.truncf %61 : vector<8x8xf32> to vector<8x8xbf16>
    %c0_13 = arith.constant 0 : index
    %c0_14 = arith.constant 0 : index
    %c0_15 = arith.constant 0 : index
    %c0_16 = arith.constant 0 : index
    %63 = vector.load %arg5[%c0_13, %c0_14, %c0_15, %c0_16] : memref<1x4x8x32xbf16, #tpu.memory_space<vmem>>, vector<1x1x8x32xbf16>
    %64 = vector.shape_cast %63 : vector<1x1x8x32xbf16> to vector<8x32xbf16>
    %cst_17 = arith.constant dense<0.000000e+00> : vector<8x32xf32>
    %65 = tpu.matmul %62, %64, %cst_17 {dimension_numbers = #tpu.dot_dimension_numbers<[1], [0], [0], [1], [0, 0, 1, 1], [], []>} : vector<8x8xbf16>, vector<8x32xbf16>, vector<8x32xf32> -> vector<8x32xf32>
    %66 = vector.extract_strided_slice %59 {offsets = [1, 0, 0], sizes = [1, 8, 8], strides = [1, 1, 1]} : vector<4x8x8xf32> to vector<1x8x8xf32>
    %67 = vector.shape_cast %66 : vector<1x8x8xf32> to vector<8x8xf32>
    %68 = arith.truncf %67 : vector<8x8xf32> to vector<8x8xbf16>
    %c0_18 = arith.constant 0 : index
    %c1 = arith.constant 1 : index
    %c0_19 = arith.constant 0 : index
    %c0_20 = arith.constant 0 : index
    %69 = vector.load %arg5[%c0_18, %c1, %c0_19, %c0_20] : memref<1x4x8x32xbf16, #tpu.memory_space<vmem>>, vector<1x1x8x32xbf16>
    %70 = vector.shape_cast %69 : vector<1x1x8x32xbf16> to vector<8x32xbf16>
    %cst_21 = arith.constant dense<0.000000e+00> : vector<8x32xf32>
    %71 = tpu.matmul %68, %70, %cst_21 {dimension_numbers = #tpu.dot_dimension_numbers<[1], [0], [0], [1], [0, 0, 1, 1], [], []>} : vector<8x8xbf16>, vector<8x32xbf16>, vector<8x32xf32> -> vector<8x32xf32>
    %72 = arith.addf %65, %71 : vector<8x32xf32>
    %73 = vector.extract_strided_slice %59 {offsets = [2, 0, 0], sizes = [1, 8, 8], strides = [1, 1, 1]} : vector<4x8x8xf32> to vector<1x8x8xf32>
    %74 = vector.shape_cast %73 : vector<1x8x8xf32> to vector<8x8xf32>
    %75 = arith.truncf %74 : vector<8x8xf32> to vector<8x8xbf16>
    %c0_22 = arith.constant 0 : index
    %c2 = arith.constant 2 : index
    %c0_23 = arith.constant 0 : index
    %c0_24 = arith.constant 0 : index
    %76 = vector.load %arg5[%c0_22, %c2, %c0_23, %c0_24] : memref<1x4x8x32xbf16, #tpu.memory_space<vmem>>, vector<1x1x8x32xbf16>
    %77 = vector.shape_cast %76 : vector<1x1x8x32xbf16> to vector<8x32xbf16>
    %cst_25 = arith.constant dense<0.000000e+00> : vector<8x32xf32>
    %78 = tpu.matmul %75, %77, %cst_25 {dimension_numbers = #tpu.dot_dimension_numbers<[1], [0], [0], [1], [0, 0, 1, 1], [], []>} : vector<8x8xbf16>, vector<8x32xbf16>, vector<8x32xf32> -> vector<8x32xf32>
    %79 = arith.addf %72, %78 : vector<8x32xf32>
    %80 = vector.extract_strided_slice %59 {offsets = [3, 0, 0], sizes = [1, 8, 8], strides = [1, 1, 1]} : vector<4x8x8xf32> to vector<1x8x8xf32>
    %81 = vector.shape_cast %80 : vector<1x8x8xf32> to vector<8x8xf32>
    %82 = arith.truncf %81 : vector<8x8xf32> to vector<8x8xbf16>
    %c0_26 = arith.constant 0 : index
    %c3 = arith.constant 3 : index
    %c0_27 = arith.constant 0 : index
    %c0_28 = arith.constant 0 : index
    %83 = vector.load %arg5[%c0_26, %c3, %c0_27, %c0_28] : memref<1x4x8x32xbf16, #tpu.memory_space<vmem>>, vector<1x1x8x32xbf16>
    %84 = vector.shape_cast %83 : vector<1x1x8x32xbf16> to vector<8x32xbf16>
    %cst_29 = arith.constant dense<0.000000e+00> : vector<8x32xf32>
    %85 = tpu.matmul %82, %84, %cst_29 {dimension_numbers = #tpu.dot_dimension_numbers<[1], [0], [0], [1], [0, 0, 1, 1], [], []>} : vector<8x8xbf16>, vector<8x32xbf16>, vector<8x32xf32> -> vector<8x32xf32>
    %86 = arith.addf %79, %85 : vector<8x32xf32>
    %c0_30 = arith.constant 0 : index
    %c0_31 = arith.constant 0 : index
    %c0_32 = arith.constant 0 : index
    %87 = vector.load %arg6[%c0_30, %c0_31, %c0_32] : memref<1x1x32xf32, #tpu.memory_space<vmem>>, vector<1x1x32xf32>
    %88 = vector.shape_cast %87 : vector<1x1x32xf32> to vector<1x32xf32>
    %89 = vector.broadcast %88 : vector<1x32xf32> to vector<8x32xf32>
    %90 = arith.addf %86, %89 : vector<8x32xf32>
    %91 = arith.addf %90, %3 : vector<8x32xf32>
    %c0_33 = arith.constant 0 : index
    %c0_34 = arith.constant 0 : index
    %c0_35 = arith.constant 0 : index
    %92 = vector.load %arg7[%c0_33, %c0_34, %c0_35] : memref<1x1x32xf32, #tpu.memory_space<vmem>>, vector<1x1x32xf32>
    %93 = vector.shape_cast %92 : vector<1x1x32xf32> to vector<1x32xf32>
    %c0_36 = arith.constant 0 : index
    %c0_37 = arith.constant 0 : index
    %c0_38 = arith.constant 0 : index
    %94 = vector.load %arg8[%c0_36, %c0_37, %c0_38] : memref<1x1x32xf32, #tpu.memory_space<vmem>>, vector<1x1x32xf32>
    %95 = vector.shape_cast %94 : vector<1x1x32xf32> to vector<1x32xf32>
    %cst_39 = arith.constant dense<0.000000e+00> : vector<8xf32>
    %96 = vector.multi_reduction <add>, %91, %cst_39 [1] : vector<8x32xf32> to vector<8xf32>
    %97 = vector.shape_cast %96 : vector<8xf32> to vector<8x1xf32>
    %cst_40 = arith.constant 3.200000e+01 : f32
    %98 = vector.broadcast %cst_40 : f32 to vector<8x1xf32>
    %99 = arith.divf %97, %98 : vector<8x1xf32>
    %100 = vector.broadcast %99 : vector<8x1xf32> to vector<8x32xf32>
    %101 = arith.subf %91, %100 : vector<8x32xf32>
    %102 = arith.mulf %101, %101 : vector<8x32xf32>
    %cst_41 = arith.constant dense<0.000000e+00> : vector<8xf32>
    %103 = vector.multi_reduction <add>, %102, %cst_41 [1] : vector<8x32xf32> to vector<8xf32>
    %104 = vector.shape_cast %103 : vector<8xf32> to vector<8x1xf32>
    %cst_42 = arith.constant 3.200000e+01 : f32
    %105 = vector.broadcast %cst_42 : f32 to vector<8x1xf32>
    %106 = arith.divf %104, %105 : vector<8x1xf32>
    %107 = vector.broadcast %99 : vector<8x1xf32> to vector<8x32xf32>
    %108 = arith.subf %91, %107 : vector<8x32xf32>
    %cst_43 = arith.constant 9.99999974E-6 : f32
    %109 = vector.broadcast %cst_43 : f32 to vector<8x1xf32>
    %110 = arith.addf %106, %109 : vector<8x1xf32>
    %111 = math.rsqrt %110 : vector<8x1xf32>
    %112 = vector.broadcast %111 : vector<8x1xf32> to vector<8x32xf32>
    %113 = arith.mulf %108, %112 : vector<8x32xf32>
    %114 = vector.broadcast %93 : vector<1x32xf32> to vector<8x32xf32>
    %115 = arith.mulf %113, %114 : vector<8x32xf32>
    %116 = vector.broadcast %95 : vector<1x32xf32> to vector<8x32xf32>
    %117 = arith.addf %115, %116 : vector<8x32xf32>
    %118 = arith.truncf %117 : vector<8x32xf32> to vector<8x32xbf16>
    %c0_44 = arith.constant 0 : index
    %c0_45 = arith.constant 0 : index
    %c0_46 = arith.constant 0 : index
    %119 = vector.load %arg9[%c0_44, %c0_45, %c0_46] : memref<1x32x128xbf16, #tpu.memory_space<vmem>>, vector<1x32x128xbf16>
    %120 = vector.shape_cast %119 : vector<1x32x128xbf16> to vector<32x128xbf16>
    %cst_47 = arith.constant dense<0.000000e+00> : vector<8x128xf32>
    %121 = tpu.matmul %118, %120, %cst_47 {dimension_numbers = #tpu.dot_dimension_numbers<[1], [0], [0], [1], [0, 0, 1, 1], [], []>} : vector<8x32xbf16>, vector<32x128xbf16>, vector<8x128xf32> -> vector<8x128xf32>
    %c0_48 = arith.constant 0 : index
    %c0_49 = arith.constant 0 : index
    %c0_50 = arith.constant 0 : index
    %122 = vector.load %arg10[%c0_48, %c0_49, %c0_50] : memref<1x1x128xf32, #tpu.memory_space<vmem>>, vector<1x1x128xf32>
    %123 = vector.shape_cast %122 : vector<1x1x128xf32> to vector<1x128xf32>
    %124 = vector.broadcast %123 : vector<1x128xf32> to vector<8x128xf32>
    %125 = arith.addf %121, %124 : vector<8x128xf32>
    %126 = arith.mulf %125, %125 : vector<8x128xf32>
    %127 = arith.mulf %125, %126 : vector<8x128xf32>
    %cst_51 = arith.constant 4.471500e-02 : f32
    %128 = vector.broadcast %cst_51 : f32 to vector<8x128xf32>
    %129 = arith.mulf %128, %127 : vector<8x128xf32>
    %130 = arith.addf %125, %129 : vector<8x128xf32>
    %cst_52 = arith.constant 0.797884583 : f32
    %131 = vector.broadcast %cst_52 : f32 to vector<8x128xf32>
    %132 = arith.mulf %131, %130 : vector<8x128xf32>
    %133 = math.tanh %132 : vector<8x128xf32>
    %cst_53 = arith.constant 1.000000e+00 : f32
    %134 = vector.broadcast %cst_53 : f32 to vector<8x128xf32>
    %135 = arith.addf %134, %133 : vector<8x128xf32>
    %cst_54 = arith.constant 5.000000e-01 : f32
    %136 = vector.broadcast %cst_54 : f32 to vector<8x128xf32>
    %137 = arith.mulf %136, %135 : vector<8x128xf32>
    %138 = arith.mulf %125, %137 : vector<8x128xf32>
    %139 = arith.truncf %138 : vector<8x128xf32> to vector<8x128xbf16>
    %c0_55 = arith.constant 0 : index
    %c0_56 = arith.constant 0 : index
    %c0_57 = arith.constant 0 : index
    %140 = vector.load %arg11[%c0_55, %c0_56, %c0_57] : memref<1x128x32xbf16, #tpu.memory_space<vmem>>, vector<1x128x32xbf16>
    %141 = vector.shape_cast %140 : vector<1x128x32xbf16> to vector<128x32xbf16>
    %cst_58 = arith.constant dense<0.000000e+00> : vector<8x32xf32>
    %142 = tpu.matmul %139, %141, %cst_58 {dimension_numbers = #tpu.dot_dimension_numbers<[1], [0], [0], [1], [0, 0, 1, 1], [], []>} : vector<8x128xbf16>, vector<128x32xbf16>, vector<8x32xf32> -> vector<8x32xf32>
    %c0_59 = arith.constant 0 : index
    %c0_60 = arith.constant 0 : index
    %c0_61 = arith.constant 0 : index
    %143 = vector.load %arg12[%c0_59, %c0_60, %c0_61] : memref<1x1x32xf32, #tpu.memory_space<vmem>>, vector<1x1x32xf32>
    %144 = vector.shape_cast %143 : vector<1x1x32xf32> to vector<1x32xf32>
    %145 = vector.broadcast %144 : vector<1x32xf32> to vector<8x32xf32>
    %146 = arith.addf %142, %145 : vector<8x32xf32>
    %147 = arith.addf %146, %117 : vector<8x32xf32>
    %c0_62 = arith.constant 0 : index
    %c0_63 = arith.constant 0 : index
    %c0_64 = arith.constant 0 : index
    %148 = vector.load %arg13[%c0_62, %c0_63, %c0_64] : memref<1x1x32xf32, #tpu.memory_space<vmem>>, vector<1x1x32xf32>
    %149 = vector.shape_cast %148 : vector<1x1x32xf32> to vector<1x32xf32>
    %c0_65 = arith.constant 0 : index
    %c0_66 = arith.constant 0 : index
    %c0_67 = arith.constant 0 : index
    %150 = vector.load %arg14[%c0_65, %c0_66, %c0_67] : memref<1x1x32xf32, #tpu.memory_space<vmem>>, vector<1x1x32xf32>
    %151 = vector.shape_cast %150 : vector<1x1x32xf32> to vector<1x32xf32>
    %cst_68 = arith.constant dense<0.000000e+00> : vector<8xf32>
    %152 = vector.multi_reduction <add>, %147, %cst_68 [1] : vector<8x32xf32> to vector<8xf32>
    %153 = vector.shape_cast %152 : vector<8xf32> to vector<8x1xf32>
    %cst_69 = arith.constant 3.200000e+01 : f32
    %154 = vector.broadcast %cst_69 : f32 to vector<8x1xf32>
    %155 = arith.divf %153, %154 : vector<8x1xf32>
    %156 = vector.broadcast %155 : vector<8x1xf32> to vector<8x32xf32>
    %157 = arith.subf %147, %156 : vector<8x32xf32>
    %158 = arith.mulf %157, %157 : vector<8x32xf32>
    %cst_70 = arith.constant dense<0.000000e+00> : vector<8xf32>
    %159 = vector.multi_reduction <add>, %158, %cst_70 [1] : vector<8x32xf32> to vector<8xf32>
    %160 = vector.shape_cast %159 : vector<8xf32> to vector<8x1xf32>
    %cst_71 = arith.constant 3.200000e+01 : f32
    %161 = vector.broadcast %cst_71 : f32 to vector<8x1xf32>
    %162 = arith.divf %160, %161 : vector<8x1xf32>
    %163 = vector.broadcast %155 : vector<8x1xf32> to vector<8x32xf32>
    %164 = arith.subf %147, %163 : vector<8x32xf32>
    %cst_72 = arith.constant 9.99999974E-6 : f32
    %165 = vector.broadcast %cst_72 : f32 to vector<8x1xf32>
    %166 = arith.addf %162, %165 : vector<8x1xf32>
    %167 = math.rsqrt %166 : vector<8x1xf32>
    %168 = vector.broadcast %167 : vector<8x1xf32> to vector<8x32xf32>
    %169 = arith.mulf %164, %168 : vector<8x32xf32>
    %170 = vector.broadcast %149 : vector<1x32xf32> to vector<8x32xf32>
    %171 = arith.mulf %169, %170 : vector<8x32xf32>
    %172 = vector.broadcast %151 : vector<1x32xf32> to vector<8x32xf32>
    %173 = arith.addf %171, %172 : vector<8x32xf32>
    %c0_73 = arith.constant 0 : index
    %c0_74 = arith.constant 0 : index
    %174 = vector.load %arg16[%c0_73, %c0_74] : memref<8x32xf32, #tpu.memory_space<vmem>>, vector<8x32xf32>
    tpu.vector_store %arg16[%c0_73, %c0_74], %173 {strides = array<i32>} : memref<8x32xf32, #tpu.memory_space<vmem>>, vector<8x32xf32>,
    %c1_i32 = arith.constant 1 : i32
    %175 = arith.cmpi eq, %arg1, %c1_i32 : i32
    %176 = arith.extui %175 : i1 to i32
    %c0_i32_75 = arith.constant 0 : i32
    %177 = arith.cmpi ne, %176, %c0_i32_75 : i32
    scf.if %177 {
      %c0_76 = arith.constant 0 : index
      %c0_77 = arith.constant 0 : index
      %c0_78 = arith.constant 0 : index
      %178 = vector.load %arg15[%c0_76, %c0_77, %c0_78] : memref<1x8x32xf32, #tpu.memory_space<vmem>>, vector<1x8x32xf32>
      %179 = vector.shape_cast %178 : vector<1x8x32xf32> to vector<8x32xf32>
      %180 = vector.shape_cast %173 : vector<8x32xf32> to vector<1x8x32xf32>
      tpu.vector_store %arg15[%c0_76, %c0_77, %c0_78], %180 {strides = array<i32>} : memref<1x8x32xf32, #tpu.memory_space<vmem>>, vector<1x8x32xf32>,
    } else {
    }
    return
  }
  func.func @transform_0(%arg0: i32, %arg1: i32) -> (i32, i32, i32) {
    %c0_i32 = arith.constant 0 : i32
    %c0_i32_0 = arith.constant 0 : i32
    %c0_i32_1 = arith.constant 0 : i32
    return %arg0, %c0_i32, %c0_i32_0 : i32, i32, i32
  }
  func.func @transform_1(%arg0: i32, %arg1: i32) -> (i32, i32, i32) {
    %c0_i32 = arith.constant 0 : i32
    %c0_i32_0 = arith.constant 0 : i32
    %c0_i32_1 = arith.constant 0 : i32
    return %arg1, %c0_i32, %c0_i32_0 : i32, i32, i32
  }
  func.func @transform_2(%arg0: i32, %arg1: i32) -> (i32, i32, i32) {
    %c0_i32 = arith.constant 0 : i32
    %c0_i32_0 = arith.constant 0 : i32
    %c0_i32_1 = arith.constant 0 : i32
    return %arg1, %c0_i32, %c0_i32_0 : i32, i32, i32
  }
  func.func @transform_3(%arg0: i32, %arg1: i32) -> (i32, i32, i32, i32) {
    %c0_i32 = arith.constant 0 : i32
    %c0_i32_0 = arith.constant 0 : i32
    %c0_i32_1 = arith.constant 0 : i32
    %c0_i32_2 = arith.constant 0 : i32
    return %arg1, %c0_i32, %c0_i32_0, %c0_i32_1 : i32, i32, i32, i32
  }
  func.func @transform_4(%arg0: i32, %arg1: i32) -> (i32, i32, i32) {
    %c0_i32 = arith.constant 0 : i32
    %c0_i32_0 = arith.constant 0 : i32
    %c0_i32_1 = arith.constant 0 : i32
    return %arg1, %c0_i32, %c0_i32_0 : i32, i32, i32
  }
  func.func @transform_5(%arg0: i32, %arg1: i32) -> (i32, i32, i32) {
    %c0_i32 = arith.constant 0 : i32
    %c0_i32_0 = arith.constant 0 : i32
    %c0_i32_1 = arith.constant 0 : i32
    return %arg1, %c0_i32, %c0_i32_0 : i32, i32, i32
  }
  func.func @transform_6(%arg0: i32, %arg1: i32) -> (i32, i32, i32) {
    %c0_i32 = arith.constant 0 : i32
    %c0_i32_0 = arith.constant 0 : i32
    %c0_i32_1 = arith.constant 0 : i32
    return %arg1, %c0_i32, %c0_i32_0 : i32, i32, i32
  }
  func.func @transform_7(%arg0: i32, %arg1: i32) -> (i32, i32, i32) {
    %c0_i32 = arith.constant 0 : i32
    %c0_i32_0 = arith.constant 0 : i32
    %c0_i32_1 = arith.constant 0 : i32
    return %arg1, %c0_i32, %c0_i32_0 : i32, i32, i32
  }
  func.func @transform_8(%arg0: i32, %arg1: i32) -> (i32, i32, i32) {
    %c0_i32 = arith.constant 0 : i32
    %c0_i32_0 = arith.constant 0 : i32
    %c0_i32_1 = arith.constant 0 : i32
    return %arg1, %c0_i32, %c0_i32_0 : i32, i32, i32
  }
  func.func @transform_9(%arg0: i32, %arg1: i32) -> (i32, i32, i32) {
    %c0_i32 = arith.constant 0 : i32
    %c0_i32_0 = arith.constant 0 : i32
    %c0_i32_1 = arith.constant 0 : i32
    return %arg1, %c0_i32, %c0_i32_0 : i32, i32, i32
  }
  func.func @transform_10(%arg0: i32, %arg1: i32) -> (i32, i32, i32) {
    %c0_i32 = arith.constant 0 : i32
    %c0_i32_0 = arith.constant 0 : i32
    %c0_i32_1 = arith.constant 0 : i32
    return %arg1, %c0_i32, %c0_i32_0 : i32, i32, i32
  }
  func.func @transform_11(%arg0: i32, %arg1: i32) -> (i32, i32, i32) {
    %c0_i32 = arith.constant 0 : i32
    %c0_i32_0 = arith.constant 0 : i32
    %c0_i32_1 = arith.constant 0 : i32
    return %arg1, %c0_i32, %c0_i32_0 : i32, i32, i32
  }
  func.func @transform_12(%arg0: i32, %arg1: i32) -> (i32, i32, i32) {
    %c0_i32 = arith.constant 0 : i32
    %c0_i32_0 = arith.constant 0 : i32
    %c0_i32_1 = arith.constant 0 : i32
    return %arg1, %c0_i32, %c0_i32_0 : i32, i32, i32
  }
  func.func @transform_13(%arg0: i32, %arg1: i32) -> (i32, i32, i32) {
    %c0_i32 = arith.constant 0 : i32
    %c0_i32_0 = arith.constant 0 : i32
    %c0_i32_1 = arith.constant 0 : i32
    return %arg0, %c0_i32, %c0_i32_0 : i32, i32, i32
  }
}

</mosaic_0001>

<llo_original>
// kernel: tpu_custom_call.1
$region0: #{tpu_custom_call.1}
  #allocation0 [shape = 'u32[]', space=smem, size = 0x4, offset = 0x4, fixed_abs, tag = 'smem constant byte address 0x4 - core index']
  #allocation1 [shape = 'u32[72,128]{1,0:T(1,128)}', space=vmem, size = 0x9000, scoped, tag = 'internal scratch']
  #allocation2 [shape = 'f32[8,32]{1,0:T(8,128)}', space=vmem, size = 0x1000, scoped, tag = 'scratch operand']
  %s0 = inlined_call_operand.vmem [shape: f32[2,8,32], index: 0, kind: input, shape index: {}]
  %s1 = inlined_call_operand.vmem [shape: bf16[2,32,96], index: 1, kind: input, shape index: {}]
  %s2 = inlined_call_operand.vmem [shape: f32[2,1,96], index: 2, kind: input, shape index: {}]
  %s3 = inlined_call_operand.vmem [shape: bf16[2,4,8,32], index: 3, kind: input, shape index: {}]
  %s4 = inlined_call_operand.vmem [shape: f32[2,1,32], index: 4, kind: input, shape index: {}]
  %s5 = inlined_call_operand.vmem [shape: f32[2,1,32], index: 5, kind: input, shape index: {}]
  %s6 = inlined_call_operand.vmem [shape: f32[2,1,32], index: 6, kind: input, shape index: {}]
  %s7 = inlined_call_operand.vmem [shape: bf16[2,32,128], index: 7, kind: input, shape index: {}]
  %s8 = inlined_call_operand.vmem [shape: f32[2,1,128], index: 8, kind: input, shape index: {}]
  %s9 = inlined_call_operand.vmem [shape: bf16[2,128,32], index: 9, kind: input, shape index: {}]
  %s10 = inlined_call_operand.vmem [shape: f32[2,1,32], index: 10, kind: input, shape index: {}]
  %s11 = inlined_call_operand.vmem [shape: f32[2,1,32], index: 11, kind: input, shape index: {}]
  %s12 = inlined_call_operand.vmem [shape: f32[2,1,32], index: 12, kind: input, shape index: {}]
  %s13 = inlined_call_operand.hbm [shape: f32[2,8,32], index: 13, kind: output, shape index: {}]
  %s14 = sld [smem:[#allocation0]]
  $region93: #{tpu_custom_call.1} parent=0
    _
  %s16 = ssub.s32 1, %s14
  %s17 = scalar_select 0, %s16, %s14
  $region1: #{tpu_custom_call.1} parent=0
    #allocation3 [shape = 'u8[8192]{0}', space=vmem, size = 0x2000, scoped, tag = 'output window, operand 0']
    #allocation4 [shape = 's32[2]{0}', space=sflag, size = 0x8, scoped, tag = 'scoped memory for tpu_custom_call.1']
    %18 = vsyncpa [#allocation4], 0
    %s19 = scalar_lea.sflag [#allocation4], 1
    %20 = vsyncpa %s19, 0
    loop: start=0, step=1, limit=6
    $region2: #{tpu_custom_call.1} parent=1 // loop_pre_header
      _
    $region3: #{tpu_custom_call.1} parent=1 // loop_header
      %s22 = sphi 0, %s26
      %p23 = scmp.ge.s32.totalorder %s22, 6
      %s29 = sphi 0, %s41
      %s30 = sphi 0, %s37
      %s31 = sphi 0, %s29
      %s32 = sphi 0, %s30
      %s33 = sphi 0, %s31
      %s34 = sphi 0, %s32
      %s44 = sphi 0, %s46
      %s47 = sphi 0, %s44
      %s48 = sphi 0, %s47
      %s64 = sphi 0, %s48
      %s70 = sphi 0, %s72
      %s73 = sphi 0, %s70
      %s74 = sphi 0, %s73
      %s90 = sphi 0, %s74
      %s96 = sphi 0, %s98
      %s99 = sphi 0, %s96
      %s100 = sphi 0, %s99
      %s116 = sphi 0, %s100
      %s122 = sphi 0, %s124
      %s125 = sphi 0, %s122
      %s126 = sphi 0, %s125
      %s142 = sphi 0, %s126
      %s148 = sphi 0, %s150
      %s151 = sphi 0, %s148
      %s152 = sphi 0, %s151
      %s168 = sphi 0, %s152
      %s174 = sphi 0, %s176
      %s177 = sphi 0, %s174
      %s178 = sphi 0, %s177
      %s194 = sphi 0, %s178
      %s200 = sphi 0, %s202
      %s203 = sphi 0, %s200
      %s204 = sphi 0, %s203
      %s220 = sphi 0, %s204
      %s226 = sphi 0, %s228
      %s229 = sphi 0, %s226
      %s230 = sphi 0, %s229
      %s246 = sphi 0, %s230
      %s252 = sphi 0, %s254
      %s255 = sphi 0, %s252
      %s256 = sphi 0, %s255
      %s272 = sphi 0, %s256
      %s278 = sphi 0, %s280
      %s281 = sphi 0, %s278
      %s282 = sphi 0, %s281
      %s298 = sphi 0, %s282
      %s304 = sphi 0, %s306
      %s307 = sphi 0, %s304
      %s308 = sphi 0, %s307
      %s324 = sphi 0, %s308
      %s330 = sphi 0, %s332
      %s333 = sphi 0, %s330
      %s334 = sphi 0, %s333
      %s350 = sphi 0, %s334
      %s356 = sphi 0, %s358
      %s359 = sphi 0, %s356
      %s360 = sphi 0, %s359
      %s376 = sphi 0, %s360
      %s382 = sphi 0, %s384
      %s385 = sphi 0, %s382
      %s386 = sphi 0, %s385
      %s402 = sphi 0, %s386
    $region4: #{tpu_custom_call.1} parent=1 // loop_header_branch
      %25 = sbr.rel (%p23) target = $region8
    $region5: #{tpu_custom_call.1} parent=1 // loop_body
      %s27 = ssub.s32 %s22, 1
      %s28 = ssub.s32 %s22, 2
      %s35 = sadd.s32 1, %s30
      %p36 = scmp.ge.s32.totalorder %s35, 2
      %s37 = scalar_select %p36, 0, %s35
      %s38 = sadd.s32 1, %s29
      %s39 = scalar_select %p36, %s38, %s29
      %p40 = scmp.ge.s32.totalorder %s39, 2
      %s41 = scalar_select %p40, 0, %s39
      %s42 = ssub.s32 %s29, %s41
      %p43 = scmp.eq.s32.totalorder %s42, 0
      %s45 = sadd.s32 %s44, 1
      %s46 = scalar_select %p43, %s44, %s45
      %p49 = pneg %p43
      %p50 = scmp.eq.s32.totalorder %s22, 3
      %p51 = por %p49, %p50
      %p52 = scmp.ne.s32.totalorder %s44, %s47
      %p53 = scmp.eq.s32.totalorder %s22, 0
      %p54 = por %p52, %p53
      %p55 = scmp.ne.s32.totalorder %s44, %s47
      %p56 = scmp.eq.s32.totalorder %s27, 3
      %p57 = por %p55, %p56
      %p58 = scmp.ne.s32.totalorder %s47, %s48
      %p59 = scmp.eq.s32.totalorder %s27, 0
      %p60 = por %p58, %p59
      %p61 = scmp.ne.s32.totalorder %s47, %s48
      %p62 = scmp.eq.s32.totalorder %s28, 3
      %p63 = por %p61, %p62
      %p65 = scmp.ne.s32.totalorder %s48, %s64
      %p66 = scmp.eq.s32.totalorder %s28, 0
      %p67 = por %p65, %p66
      %s68 = ssub.s32 %s30, %s37
      %p69 = scmp.eq.s32.totalorder %s68, 0
      %s71 = sadd.s32 %s70, 1
      %s72 = scalar_select %p69, %s70, %s71
      %p75 = pneg %p69
      %p76 = scmp.eq.s32.totalorder %s22, 3
      %p77 = por %p75, %p76
      %p78 = scmp.ne.s32.totalorder %s70, %s73
      %p79 = scmp.eq.s32.totalorder %s22, 0
      %p80 = por %p78, %p79
      %p81 = scmp.ne.s32.totalorder %s70, %s73
      %p82 = scmp.eq.s32.totalorder %s27, 3
      %p83 = por %p81, %p82
      %p84 = scmp.ne.s32.totalorder %s73, %s74
      %p85 = scmp.eq.s32.totalorder %s27, 0
      %p86 = por %p84, %p85
      %p87 = scmp.ne.s32.totalorder %s73, %s74
      %p88 = scmp.eq.s32.totalorder %s28, 3
      %p89 = por %p87, %p88
      %p91 = scmp.ne.s32.totalorder %s74, %s90
      %p92 = scmp.eq.s32.totalorder %s28, 0
      %p93 = por %p91, %p92
      %s94 = ssub.s32 %s30, %s37
      %p95 = scmp.eq.s32.totalorder %s94, 0
      %s97 = sadd.s32 %s96, 1
      %s98 = scalar_select %p95, %s96, %s97
      %p101 = pneg %p95
      %p102 = scmp.eq.s32.totalorder %s22, 3
      %p103 = por %p101, %p102
      %p104 = scmp.ne.s32.totalorder %s96, %s99
      %p105 = scmp.eq.s32.totalorder %s22, 0
      %p106 = por %p104, %p105
      %p107 = scmp.ne.s32.totalorder %s96, %s99
      %p108 = scmp.eq.s32.totalorder %s27, 3
      %p109 = por %p107, %p108
      %p110 = scmp.ne.s32.totalorder %s99, %s100
      %p111 = scmp.eq.s32.totalorder %s27, 0
      %p112 = por %p110, %p111
      %p113 = scmp.ne.s32.totalorder %s99, %s100
      %p114 = scmp.eq.s32.totalorder %s28, 3
      %p115 = por %p113, %p114
      %p117 = scmp.ne.s32.totalorder %s100, %s116
      %p118 = scmp.eq.s32.totalorder %s28, 0
      %p119 = por %p117, %p118
      %s120 = ssub.s32 %s30, %s37
      %p121 = scmp.eq.s32.totalorder %s120, 0
      %s123 = sadd.s32 %s122, 1
      %s124 = scalar_select %p121, %s122, %s123
      %p127 = pneg %p121
      %p128 = scmp.eq.s32.totalorder %s22, 3
      %p129 = por %p127, %p128
      %p130 = scmp.ne.s32.totalorder %s122, %s125
      %p131 = scmp.eq.s32.totalorder %s22, 0
      %p132 = por %p130, %p131
      %p133 = scmp.ne.s32.totalorder %s122, %s125
      %p134 = scmp.eq.s32.totalorder %s27, 3
      %p135 = por %p133, %p134
      %p136 = scmp.ne.s32.totalorder %s125, %s126
      %p137 = scmp.eq.s32.totalorder %s27, 0
      %p138 = por %p136, %p137
      %p139 = scmp.ne.s32.totalorder %s125, %s126
      %p140 = scmp.eq.s32.totalorder %s28, 3
      %p141 = por %p139, %p140
      %p143 = scmp.ne.s32.totalorder %s126, %s142
      %p144 = scmp.eq.s32.totalorder %s28, 0
      %p145 = por %p143, %p144
      %s146 = ssub.s32 %s30, %s37
      %p147 = scmp.eq.s32.totalorder %s146, 0
      %s149 = sadd.s32 %s148, 1
      %s150 = scalar_select %p147, %s148, %s149
      %p153 = pneg %p147
      %p154 = scmp.eq.s32.totalorder %s22, 3
      %p155 = por %p153, %p154
      %p156 = scmp.ne.s32.totalorder %s148, %s151
      %p157 = scmp.eq.s32.totalorder %s22, 0
      %p158 = por %p156, %p157
      %p159 = scmp.ne.s32.totalorder %s148, %s151
      %p160 = scmp.eq.s32.totalorder %s27, 3
      %p161 = por %p159, %p160
      %p162 = scmp.ne.s32.totalorder %s151, %s152
      %p163 = scmp.eq.s32.totalorder %s27, 0
      %p164 = por %p162, %p163
      %p165 = scmp.ne.s32.totalorder %s151, %s152
      %p166 = scmp.eq.s32.totalorder %s28, 3
      %p167 = por %p165, %p166
      %p169 = scmp.ne.s32.totalorder %s152, %s168
      %p170 = scmp.eq.s32.totalorder %s28, 0
      %p171 = por %p169, %p170
      %s172 = ssub.s32 %s30, %s37
      %p173 = scmp.eq.s32.totalorder %s172, 0
      %s175 = sadd.s32 %s174, 1
      %s176 = scalar_select %p173, %s174, %s175
      %p179 = pneg %p173
      %p180 = scmp.eq.s32.totalorder %s22, 3
      %p181 = por %p179, %p180
      %p182 = scmp.ne.s32.totalorder %s174, %s177
      %p183 = scmp.eq.s32.totalorder %s22, 0
      %p184 = por %p182, %p183
      %p185 = scmp.ne.s32.totalorder %s174, %s177
      %p186 = scmp.eq.s32.totalorder %s27, 3
      %p187 = por %p185, %p186
      %p188 = scmp.ne.s32.totalorder %s177, %s178
      %p189 = scmp.eq.s32.totalorder %s27, 0
      %p190 = por %p188, %p189
      %p191 = scmp.ne.s32.totalorder %s177, %s178
      %p192 = scmp.eq.s32.totalorder %s28, 3
      %p193 = por %p191, %p192
      %p195 = scmp.ne.s32.totalorder %s178, %s194
      %p196 = scmp.eq.s32.totalorder %s28, 0
      %p197 = por %p195, %p196
      %s198 = ssub.s32 %s30, %s37
      %p199 = scmp.eq.s32.totalorder %s198, 0
      %s201 = sadd.s32 %s200, 1
      %s202 = scalar_select %p199, %s200, %s201
      %p205 = pneg %p199
      %p206 = scmp.eq.s32.totalorder %s22, 3
      %p207 = por %p205, %p206
      %p208 = scmp.ne.s32.totalorder %s200, %s203
      %p209 = scmp.eq.s32.totalorder %s22, 0
      %p210 = por %p208, %p209
      %p211 = scmp.ne.s32.totalorder %s200, %s203
      %p212 = scmp.eq.s32.totalorder %s27, 3
      %p213 = por %p211, %p212
      %p214 = scmp.ne.s32.totalorder %s203, %s204
      %p215 = scmp.eq.s32.totalorder %s27, 0
      %p216 = por %p214, %p215
      %p217 = scmp.ne.s32.totalorder %s203, %s204
      %p218 = scmp.eq.s32.totalorder %s28, 3
      %p219 = por %p217, %p218
      %p221 = scmp.ne.s32.totalorder %s204, %s220
      %p222 = scmp.eq.s32.totalorder %s28, 0
      %p223 = por %p221, %p222
      %s224 = ssub.s32 %s30, %s37
      %p225 = scmp.eq.s32.totalorder %s224, 0
      %s227 = sadd.s32 %s226, 1
      %s228 = scalar_select %p225, %s226, %s227
      %p231 = pneg %p225
      %p232 = scmp.eq.s32.totalorder %s22, 3
      %p233 = por %p231, %p232
      %p234 = scmp.ne.s32.totalorder %s226, %s229
      %p235 = scmp.eq.s32.totalorder %s22, 0
      %p236 = por %p234, %p235
      %p237 = scmp.ne.s32.totalorder %s226, %s229
      %p238 = scmp.eq.s32.totalorder %s27, 3
      %p239 = por %p237, %p238
      %p240 = scmp.ne.s32.totalorder %s229, %s230
      %p241 = scmp.eq.s32.totalorder %s27, 0
      %p242 = por %p240, %p241
      %p243 = scmp.ne.s32.totalorder %s229, %s230
      %p244 = scmp.eq.s32.totalorder %s28, 3
      %p245 = por %p243, %p244
      %p247 = scmp.ne.s32.totalorder %s230, %s246
      %p248 = scmp.eq.s32.totalorder %s28, 0
      %p249 = por %p247, %p248
      %s250 = ssub.s32 %s30, %s37
      %p251 = scmp.eq.s32.totalorder %s250, 0
      %s253 = sadd.s32 %s252, 1
      %s254 = scalar_select %p251, %s252, %s253
      %p257 = pneg %p251
      %p258 = scmp.eq.s32.totalorder %s22, 3
      %p259 = por %p257, %p258
      %p260 = scmp.ne.s32.totalorder %s252, %s255
      %p261 = scmp.eq.s32.totalorder %s22, 0
      %p262 = por %p260, %p261
      %p263 = scmp.ne.s32.totalorder %s252, %s255
      %p264 = scmp.eq.s32.totalorder %s27, 3
      %p265 = por %p263, %p264
      %p266 = scmp.ne.s32.totalorder %s255, %s256
      %p267 = scmp.eq.s32.totalorder %s27, 0
      %p268 = por %p266, %p267
      %p269 = scmp.ne.s32.totalorder %s255, %s256
      %p270 = scmp.eq.s32.totalorder %s28, 3
      %p271 = por %p269, %p270
      %p273 = scmp.ne.s32.totalorder %s256, %s272
      %p274 = scmp.eq.s32.totalorder %s28, 0
      %p275 = por %p273, %p274
      %s276 = ssub.s32 %s30, %s37
      %p277 = scmp.eq.s32.totalorder %s276, 0
      %s279 = sadd.s32 %s278, 1
      %s280 = scalar_select %p277, %s278, %s279
      %p283 = pneg %p277
      %p284 = scmp.eq.s32.totalorder %s22, 3
      %p285 = por %p283, %p284
      %p286 = scmp.ne.s32.totalorder %s278, %s281
      %p287 = scmp.eq.s32.totalorder %s22, 0
      %p288 = por %p286, %p287
      %p289 = scmp.ne.s32.totalorder %s278, %s281
      %p290 = scmp.eq.s32.totalorder %s27, 3
      %p291 = por %p289, %p290
      %p292 = scmp.ne.s32.totalorder %s281, %s282
      %p293 = scmp.eq.s32.totalorder %s27, 0
      %p294 = por %p292, %p293
      %p295 = scmp.ne.s32.totalorder %s281, %s282
      %p296 = scmp.eq.s32.totalorder %s28, 3
      %p297 = por %p295, %p296
      %p299 = scmp.ne.s32.totalorder %s282, %s298
      %p300 = scmp.eq.s32.totalorder %s28, 0
      %p301 = por %p299, %p300
      %s302 = ssub.s32 %s30, %s37
      %p303 = scmp.eq.s32.totalorder %s302, 0
      %s305 = sadd.s32 %s304, 1
      %s306 = scalar_select %p303, %s304, %s305
      %p309 = pneg %p303
      %p310 = scmp.eq.s32.totalorder %s22, 3
      %p311 = por %p309, %p310
      %p312 = scmp.ne.s32.totalorder %s304, %s307
      %p313 = scmp.eq.s32.totalorder %s22, 0
      %p314 = por %p312, %p313
      %p315 = scmp.ne.s32.totalorder %s304, %s307
      %p316 = scmp.eq.s32.totalorder %s27, 3
      %p317 = por %p315, %p316
      %p318 = scmp.ne.s32.totalorder %s307, %s308
      %p319 = scmp.eq.s32.totalorder %s27, 0
      %p320 = por %p318, %p319
      %p321 = scmp.ne.s32.totalorder %s307, %s308
      %p322 = scmp.eq.s32.totalorder %s28, 3
      %p323 = por %p321, %p322
      %p325 = scmp.ne.s32.totalorder %s308, %s324
      %p326 = scmp.eq.s32.totalorder %s28, 0
      %p327 = por %p325, %p326
      %s328 = ssub.s32 %s30, %s37
      %p329 = scmp.eq.s32.totalorder %s328, 0
      %s331 = sadd.s32 %s330, 1
      %s332 = scalar_select %p329, %s330, %s331
      %p335 = pneg %p329
      %p336 = scmp.eq.s32.totalorder %s22, 3
      %p337 = por %p335, %p336
      %p338 = scmp.ne.s32.totalorder %s330, %s333
      %p339 = scmp.eq.s32.totalorder %s22, 0
      %p340 = por %p338, %p339
      %p341 = scmp.ne.s32.totalorder %s330, %s333
      %p342 = scmp.eq.s32.totalorder %s27, 3
      %p343 = por %p341, %p342
      %p344 = scmp.ne.s32.totalorder %s333, %s334
      %p345 = scmp.eq.s32.totalorder %s27, 0
      %p346 = por %p344, %p345
      %p347 = scmp.ne.s32.totalorder %s333, %s334
      %p348 = scmp.eq.s32.totalorder %s28, 3
      %p349 = por %p347, %p348
      %p351 = scmp.ne.s32.totalorder %s334, %s350
      %p352 = scmp.eq.s32.totalorder %s28, 0
      %p353 = por %p351, %p352
      %s354 = ssub.s32 %s30, %s37
      %p355 = scmp.eq.s32.totalorder %s354, 0
      %s357 = sadd.s32 %s356, 1
      %s358 = scalar_select %p355, %s356, %s357
      %p361 = pneg %p355
      %p362 = scmp.eq.s32.totalorder %s22, 3
      %p363 = por %p361, %p362
      %p364 = scmp.ne.s32.totalorder %s356, %s359
      %p365 = scmp.eq.s32.totalorder %s22, 0
      %p366 = por %p364, %p365
      %p367 = scmp.ne.s32.totalorder %s356, %s359
      %p368 = scmp.eq.s32.totalorder %s27, 3
      %p369 = por %p367, %p368
      %p370 = scmp.ne.s32.totalorder %s359, %s360
      %p371 = scmp.eq.s32.totalorder %s27, 0
      %p372 = por %p370, %p371
      %p373 = scmp.ne.s32.totalorder %s359, %s360
      %p374 = scmp.eq.s32.totalorder %s28, 3
      %p375 = por %p373, %p374
      %p377 = scmp.ne.s32.totalorder %s360, %s376
      %p378 = scmp.eq.s32.totalorder %s28, 0
      %p379 = por %p377, %p378
      %s380 = ssub.s32 %s29, %s41
      %p381 = scmp.eq.s32.totalorder %s380, 0
      %s383 = sadd.s32 %s382, 1
      %s384 = scalar_select %p381, %s382, %s383
      %p387 = pneg %p381
      %p388 = scmp.eq.s32.totalorder %s22, 3
      %p389 = por %p387, %p388
      %p390 = scmp.ne.s32.totalorder %s382, %s385
      %p391 = scmp.eq.s32.totalorder %s22, 0
      %p392 = por %p390, %p391
      %p393 = scmp.ne.s32.totalorder %s382, %s385
      %p394 = scmp.eq.s32.totalorder %s27, 3
      %p395 = por %p393, %p394
      %p396 = scmp.ne.s32.totalorder %s385, %s386
      %p397 = scmp.eq.s32.totalorder %s27, 0
      %p398 = por %p396, %p397
      %p399 = scmp.ne.s32.totalorder %s385, %s386
      %p400 = scmp.eq.s32.totalorder %s28, 3
      %p401 = por %p399, %p400
      %p403 = scmp.ne.s32.totalorder %s386, %s402
      %p404 = scmp.eq.s32.totalorder %s28, 0
      %p405 = por %p403, %p404
      %p406 = scmp.le.s32.totalorder 1, %s22
      %p407 = scmp.lt.s32.totalorder %s22, 5
      %p408 = pnand %p406, %p407
      %p409 = pneg %p408
      // Predicated region
      $region9: #{tpu_custom_call.1} parent=5 // pred_check
        _
      $region10: #{tpu_custom_call.1} parent=5 // pred_check_branch
        %411 = sbr.rel (%p408) target = $region12
      $region11: #{tpu_custom_call.1} parent=5 // pred_region
        %s412 = ssub.s32 %s22, 1
      $region12: #{tpu_custom_call.1} parent=5 // pred_fallthru
        _
      %p413 = scmp.lt.s32.totalorder %s22, 4
      // Predicated region
      $region13: #{tpu_custom_call.1} parent=5 // pred_check
        %p414 = pneg %p413
      $region14: #{tpu_custom_call.1} parent=5 // pred_check_branch
        %416 = sbr.rel (%p414) target = $region16
      $region15: #{tpu_custom_call.1} parent=5 // pred_region
        // Predicated region
        $region17: #{tpu_custom_call.1} parent=15 // pred_check
          %p417 = pneg %p54
        $region18: #{tpu_custom_call.1} parent=15 // pred_check_branch
          %419 = sbr.rel (%p417) target = $region20
        $region19: #{tpu_custom_call.1} parent=15 // pred_region
          %p420 = scmp.lt.s32.totalorder %s29, 1
          %s421 = scalar_select %p420, %s29, 1
          %s422 = smul.addr %s421, 8
          %s423 = scalar_lea.vmem %s0, %s422
        $region20: #{tpu_custom_call.1} parent=15 // pred_fallthru
          _
        // Predicated region
        $region21: #{tpu_custom_call.1} parent=15 // pred_check
          %p424 = pneg %p80
        $region22: #{tpu_custom_call.1} parent=15 // pred_check_branch
          %426 = sbr.rel (%p424) target = $region24
        $region23: #{tpu_custom_call.1} parent=15 // pred_region
          %p427 = scmp.lt.s32.totalorder %s30, 1
          %s428 = scalar_select %p427, %s30, 1
          %s429 = smul.addr %s428, 4
          %s430 = smul.addr %s429, 4
          %s431 = scalar_lea.vmem %s1, %s430
        $region24: #{tpu_custom_call.1} parent=15 // pred_fallthru
          _
        // Predicated region
        $region25: #{tpu_custom_call.1} parent=15 // pred_check
          %p432 = pneg %p106
        $region26: #{tpu_custom_call.1} parent=15 // pred_check_branch
          %434 = sbr.rel (%p432) target = $region28
        $region27: #{tpu_custom_call.1} parent=15 // pred_region
          %p435 = scmp.lt.s32.totalorder %s30, 1
          %s436 = scalar_select %p435, %s30, 1
          %s437 = scalar_lea.vmem %s2, %s436
        $region28: #{tpu_custom_call.1} parent=15 // pred_fallthru
          _
        // Predicated region
        $region29: #{tpu_custom_call.1} parent=15 // pred_check
          %p438 = pneg %p132
        $region30: #{tpu_custom_call.1} parent=15 // pred_check_branch
          %440 = sbr.rel (%p438) target = $region32
        $region31: #{tpu_custom_call.1} parent=15 // pred_region
          %p441 = scmp.lt.s32.totalorder %s30, 1
          %s442 = scalar_select %p441, %s30, 1
          %s443 = smul.addr %s442, 4
          %s444 = smul.addr %s443, 4
          %s445 = scalar_lea.vmem %s3, %s444
        $region32: #{tpu_custom_call.1} parent=15 // pred_fallthru
          _
        // Predicated region
        $region33: #{tpu_custom_call.1} parent=15 // pred_check
          %p446 = pneg %p158
        $region34: #{tpu_custom_call.1} parent=15 // pred_check_branch
          %448 = sbr.rel (%p446) target = $region36
        $region35: #{tpu_custom_call.1} parent=15 // pred_region
          %p449 = scmp.lt.s32.totalorder %s30, 1
          %s450 = scalar_select %p449, %s30, 1
          %s451 = scalar_lea.vmem %s4, %s450
        $region36: #{tpu_custom_call.1} parent=15 // pred_fallthru
          _
        // Predicated region
        $region37: #{tpu_custom_call.1} parent=15 // pred_check
          %p452 = pneg %p184
        $region38: #{tpu_custom_call.1} parent=15 // pred_check_branch
          %454 = sbr.rel (%p452) target = $region40
        $region39: #{tpu_custom_call.1} parent=15 // pred_region
          %p455 = scmp.lt.s32.totalorder %s30, 1
          %s456 = scalar_select %p455, %s30, 1
          %s457 = scalar_lea.vmem %s5, %s456
        $region40: #{tpu_custom_call.1} parent=15 // pred_fallthru
          _
        // Predicated region
        $region41: #{tpu_custom_call.1} parent=15 // pred_check
          %p458 = pneg %p210
        $region42: #{tpu_custom_call.1} parent=15 // pred_check_branch
          %460 = sbr.rel (%p458) target = $region44
        $region43: #{tpu_custom_call.1} parent=15 // pred_region
          %p461 = scmp.lt.s32.totalorder %s30, 1
          %s462 = scalar_select %p461, %s30, 1
          %s463 = scalar_lea.vmem %s6, %s462
        $region44: #{tpu_custom_call.1} parent=15 // pred_fallthru
          _
        // Predicated region
        $region45: #{tpu_custom_call.1} parent=15 // pred_check
          %p464 = pneg %p236
        $region46: #{tpu_custom_call.1} parent=15 // pred_check_branch
          %466 = sbr.rel (%p464) target = $region48
        $region47: #{tpu_custom_call.1} parent=15 // pred_region
          %p467 = scmp.lt.s32.totalorder %s30, 1
          %s468 = scalar_select %p467, %s30, 1
          %s469 = smul.addr %s468, 4
          %s470 = smul.addr %s469, 4
          %s471 = scalar_lea.vmem %s7, %s470
        $region48: #{tpu_custom_call.1} parent=15 // pred_fallthru
          _
        // Predicated region
        $region49: #{tpu_custom_call.1} parent=15 // pred_check
          %p472 = pneg %p262
        $region50: #{tpu_custom_call.1} parent=15 // pred_check_branch
          %474 = sbr.rel (%p472) target = $region52
        $region51: #{tpu_custom_call.1} parent=15 // pred_region
          %p475 = scmp.lt.s32.totalorder %s30, 1
          %s476 = scalar_select %p475, %s30, 1
          %s477 = scalar_lea.vmem %s8, %s476
        $region52: #{tpu_custom_call.1} parent=15 // pred_fallthru
          _
        // Predicated region
        $region53: #{tpu_custom_call.1} parent=15 // pred_check
          %p478 = pneg %p288
        $region54: #{tpu_custom_call.1} parent=15 // pred_check_branch
          %480 = sbr.rel (%p478) target = $region56
        $region55: #{tpu_custom_call.1} parent=15 // pred_region
          %p481 = scmp.lt.s32.totalorder %s30, 1
          %s482 = scalar_select %p481, %s30, 1
          %s483 = smul.addr %s482, 16
          %s484 = smul.addr %s483, 4
          %s485 = scalar_lea.vmem %s9, %s484
        $region56: #{tpu_custom_call.1} parent=15 // pred_fallthru
          _
        // Predicated region
        $region57: #{tpu_custom_call.1} parent=15 // pred_check
          %p486 = pneg %p314
        $region58: #{tpu_custom_call.1} parent=15 // pred_check_branch
          %488 = sbr.rel (%p486) target = $region60
        $region59: #{tpu_custom_call.1} parent=15 // pred_region
          %p489 = scmp.lt.s32.totalorder %s30, 1
          %s490 = scalar_select %p489, %s30, 1
          %s491 = scalar_lea.vmem %s10, %s490
        $region60: #{tpu_custom_call.1} parent=15 // pred_fallthru
          _
        // Predicated region
        $region61: #{tpu_custom_call.1} parent=15 // pred_check
          %p492 = pneg %p340
        $region62: #{tpu_custom_call.1} parent=15 // pred_check_branch
          %494 = sbr.rel (%p492) target = $region64
        $region63: #{tpu_custom_call.1} parent=15 // pred_region
          %p495 = scmp.lt.s32.totalorder %s30, 1
          %s496 = scalar_select %p495, %s30, 1
          %s497 = scalar_lea.vmem %s11, %s496
        $region64: #{tpu_custom_call.1} parent=15 // pred_fallthru
          _
        // Predicated region
        $region65: #{tpu_custom_call.1} parent=15 // pred_check
          %p498 = pneg %p366
        $region66: #{tpu_custom_call.1} parent=15 // pred_check_branch
          %500 = sbr.rel (%p498) target = $region68
        $region67: #{tpu_custom_call.1} parent=15 // pred_region
          %p501 = scmp.lt.s32.totalorder %s30, 1
          %s502 = scalar_select %p501, %s30, 1
          %s503 = scalar_lea.vmem %s12, %s502
        $region68: #{tpu_custom_call.1} parent=15 // pred_fallthru
          _
      $region16: #{tpu_custom_call.1} parent=5 // pred_fallthru
        _
      %p504 = scmp.le.s32.totalorder 1, %s22
      %p505 = scmp.lt.s32.totalorder %s22, 5
      %p506 = pnand %p504, %p505
      %p507 = pneg %p506
      // Predicated region
      $region69: #{tpu_custom_call.1} parent=5 // pred_check
        _
      $region70: #{tpu_custom_call.1} parent=5 // pred_check_branch
        %509 = sbr.rel (%p506) target = $region72
      $region71: #{tpu_custom_call.1} parent=5 // pred_region
        %s510 = ssub.s32 %s22, 1
        %p511 = scmp.lt.s32.totalorder %s31, 1
        %s512 = scalar_select %p511, %s31, 1
        %s513 = smul.addr %s512, 8
        %s514 = scalar_lea.vmem %s0, %s513
        %p515 = pneg %p60
        %p516 = pneg %p57
        %p517 = scmp.lt.s32.totalorder %s32, 1
        %s518 = scalar_select %p517, %s32, 1
        %s519 = smul.addr %s518, 4
        %s520 = smul.addr %s519, 4
        %s521 = scalar_lea.vmem %s1, %s520
        %p522 = pneg %p86
        %p523 = pneg %p83
        %p524 = scmp.lt.s32.totalorder %s32, 1
        %s525 = scalar_select %p524, %s32, 1
        %s526 = scalar_lea.vmem %s2, %s525
        %p527 = pneg %p112
        %p528 = pneg %p109
        %p529 = scmp.lt.s32.totalorder %s32, 1
        %s530 = scalar_select %p529, %s32, 1
        %s531 = smul.addr %s530, 4
        %s532 = smul.addr %s531, 4
        %s533 = scalar_lea.vmem %s3, %s532
        %p534 = pneg %p138
        %p535 = pneg %p135
        %p536 = scmp.lt.s32.totalorder %s32, 1
        %s537 = scalar_select %p536, %s32, 1
        %s538 = scalar_lea.vmem %s4, %s537
        %p539 = pneg %p164
        %p540 = pneg %p161
        %p541 = scmp.lt.s32.totalorder %s32, 1
        %s542 = scalar_select %p541, %s32, 1
        %s543 = scalar_lea.vmem %s5, %s542
        %p544 = pneg %p190
        %p545 = pneg %p187
        %p546 = scmp.lt.s32.totalorder %s32, 1
        %s547 = scalar_select %p546, %s32, 1
        %s548 = scalar_lea.vmem %s6, %s547
        %p549 = pneg %p216
        %p550 = pneg %p213
        %p551 = scmp.lt.s32.totalorder %s32, 1
        %s552 = scalar_select %p551, %s32, 1
        %s553 = smul.addr %s552, 4
        %s554 = smul.addr %s553, 4
        %s555 = scalar_lea.vmem %s7, %s554
        %p556 = pneg %p242
        %p557 = pneg %p239
        %p558 = scmp.lt.s32.totalorder %s32, 1
        %s559 = scalar_select %p558, %s32, 1
        %s560 = scalar_lea.vmem %s8, %s559
        %p561 = pneg %p268
        %p562 = pneg %p265
        %p563 = scmp.lt.s32.totalorder %s32, 1
        %s564 = scalar_select %p563, %s32, 1
        %s565 = smul.addr %s564, 16
        %s566 = smul.addr %s565, 4
        %s567 = scalar_lea.vmem %s9, %s566
        %p568 = pneg %p294
        %p569 = pneg %p291
        %p570 = scmp.lt.s32.totalorder %s32, 1
        %s571 = scalar_select %p570, %s32, 1
        %s572 = scalar_lea.vmem %s10, %s571
        %p573 = pneg %p320
        %p574 = pneg %p317
        %p575 = scmp.lt.s32.totalorder %s32, 1
        %s576 = scalar_select %p575, %s32, 1
        %s577 = scalar_lea.vmem %s11, %s576
        %p578 = pneg %p346
        %p579 = pneg %p343
        %p580 = scmp.lt.s32.totalorder %s32, 1
        %s581 = scalar_select %p580, %s32, 1
        %s582 = scalar_lea.vmem %s12, %s581
        %p583 = pneg %p372
        %p584 = pneg %p369
        %p585 = pneg %p398
        %p586 = pneg %p395
        %s587 = sand.u32 %s385, 1
        %s588 = scalar_lea.sflag [#allocation4], %s587
        %s589 = sand.u32 %s385, 1
        %s590 = smul.addr %s589, 8
        %s591 = scalar_lea.vmem [#allocation3], %s590
        %p592 = scmp.lt.s32.totalorder %s31, 1
        %s593 = scalar_select %p592, %s31, 1
        %s594 = smul.addr %s593, 8
        %s595 = scalar_lea.vmem %s0, %s594
        %p596 = scmp.lt.s32.totalorder %s32, 1
        %s597 = scalar_select %p596, %s32, 1
        %s598 = smul.addr %s597, 4
        %s599 = smul.addr %s598, 4
        %s600 = scalar_lea.vmem %s1, %s599
        %p601 = scmp.lt.s32.totalorder %s32, 1
        %s602 = scalar_select %p601, %s32, 1
        %s603 = scalar_lea.vmem %s2, %s602
        %p604 = scmp.lt.s32.totalorder %s32, 1
        %s605 = scalar_select %p604, %s32, 1
        %s606 = smul.addr %s605, 4
        %s607 = smul.addr %s606, 4
        %s608 = scalar_lea.vmem %s3, %s607
        %p609 = scmp.lt.s32.totalorder %s32, 1
        %s610 = scalar_select %p609, %s32, 1
        %s611 = scalar_lea.vmem %s4, %s610
        %p612 = scmp.lt.s32.totalorder %s32, 1
        %s613 = scalar_select %p612, %s32, 1
        %s614 = scalar_lea.vmem %s5, %s613
        %p615 = scmp.lt.s32.totalorder %s32, 1
        %s616 = scalar_select %p615, %s32, 1
        %s617 = scalar_lea.vmem %s6, %s616
        %p618 = scmp.lt.s32.totalorder %s32, 1
        %s619 = scalar_select %p618, %s32, 1
        %s620 = smul.addr %s619, 4
        %s621 = smul.addr %s620, 4
        %s622 = scalar_lea.vmem %s7, %s621
        %p623 = scmp.lt.s32.totalorder %s32, 1
        %s624 = scalar_select %p623, %s32, 1
        %s625 = scalar_lea.vmem %s8, %s624
        %p626 = scmp.lt.s32.totalorder %s32, 1
        %s627 = scalar_select %p626, %s32, 1
        %s628 = smul.addr %s627, 16
        %s629 = smul.addr %s628, 4
        %s630 = scalar_lea.vmem %s9, %s629
        %p631 = scmp.lt.s32.totalorder %s32, 1
        %s632 = scalar_select %p631, %s32, 1
        %s633 = scalar_lea.vmem %s10, %s632
        %p634 = scmp.lt.s32.totalorder %s32, 1
        %s635 = scalar_select %p634, %s32, 1
        %s636 = scalar_lea.vmem %s11, %s635
        %p637 = scmp.lt.s32.totalorder %s32, 1
        %s638 = scalar_select %p637, %s32, 1
        %s639 = scalar_lea.vmem %s12, %s638
        %p641 = scmp.eq.s32.totalorder %s32, 0
        // Predicated region
        $region73: #{tpu_custom_call.1} parent=71 // pred_check
          %p642 = pneg %p641
        $region74: #{tpu_custom_call.1} parent=71 // pred_check_branch
          %644 = sbr.rel (%p642) target = $region76
        $region75: #{tpu_custom_call.1} parent=71 // pred_region
          %v645 = vld [vmem:[%s595] sm:$0xff]
          %vm646 = vcmask 261120
          %647 = vst.msk [vmem:[#allocation2] sm:$0xff] %vm646, %v645
        $region76: #{tpu_custom_call.1} parent=71 // pred_fallthru
          _
        %v648 = vld [vmem:[#allocation2] sm:$0xff]
        %v649 = vpack.c.bf16 %v648, %v648
        %v650 = vld [vmem:[%s600] sm:$0xf]
        %v651 = vld [vmem:[%s600 + $0x4] sm:$0xf]
        %v652 = vld [vmem:[%s600 + $0x8] sm:$0xf]
        %v653 = vld [vmem:[%s600 + $0xc] sm:$0xf]
        %v654 = vld [vmem:[%s603] sm:$0x1]
        %v656 = vperm.slane %v654, 0
        %v662 = vunpack.c.l.b16 %v650
        %v663 = vunpack.c.l.b16 %v651
        %v664 = vunpack.c.l.b16 %v652
        %v665 = vunpack.c.l.b16 %v653
        %v666 = vpack.c.b16 %v663, %v662
        %v667 = vpack.c.b16 %v665, %v664
        %vm670 = vcmask 261120
        %v672 = vsel %vm670, %v649, 0
        %674 = vmatpush.bf16.msra.mxu0 0
        %675 = vmatpush.bf16.msra.mxu0 0
        %676 = vmatpush.bf16.msra.mxu0 0
        %677 = vmatpush.bf16.msra.mxu0 0
        %678 = vmatpush.bf16.msra.mxu0 0
        %679 = vmatpush.bf16.msra.mxu0 0
        %680 = vmatpush.bf16.msra.mxu0 %v667
        %681 = vmatpush.bf16.msra.mxu0 %v666
        %682 = vmatmul.bf16.gmra.mxu0 %v672
        %v683 = vpop.f32.mrf.mxu0
        %v684 = vadd.f32 %v656, %v683
        %v685 = vpop.f32.mrf.mxu0
        %686 = vdwg.mxu0
        %v687 = vmul.f32 %v684, 0.35355338
        %689 = vrot.lane.b32.xlu0 %v687, 120
        %v690 = vpop.permute.xlu0 %689
        %692 = vrot.lane.b32.xlu0 %v687, 112
        %v693 = vpop.permute.xlu0 %692
        %695 = vrot.lane.b32.xlu0 %v687, 104
        %v696 = vpop.permute.xlu0 %695
        %v698 = vpack.c.bf16 %v687, %v687
        %v699 = vpack.c.bf16 %v690, %v690
        %v700 = vpack.c.bf16 %v693, %v693
        %v701 = vpack.c.bf16 %v696, %v696
        %703 = vrot.lane.b32.xlu0 %v684, 120
        %v704 = vpop.permute.xlu0 %703
        %706 = vrot.lane.b32.xlu0 %v684, 112
        %v707 = vpop.permute.xlu0 %706
        %709 = vrot.lane.b32.xlu0 %v684, 104
        %v710 = vpop.permute.xlu0 %709
        %v712 = vpack.c.bf16 %v684, %v684
        %v713 = vpack.c.bf16 %v704, %v704
        %v714 = vpack.c.bf16 %v707, %v707
        %v715 = vpack.c.bf16 %v710, %v710
        %v717 = vunpack.c.l.b16 %v712
        %v718 = vpack.c.b16 %v717, %v717
        %719 = vrot.lane.b32.xlu0 %v718, 96
        %v720 = vpop.permute.xlu0 %719
        %vm721 = vcmask 64512
        %v723 = vsel %vm721, %v698, 0
        %v726 = vsel %vm721, %v720, 0
        %728 = vmatpush.bf16.xpose.msra.mxu0 0
        %729 = vmatpush.bf16.xpose.msra.mxu0 0
        %730 = vmatpush.bf16.xpose.msra.mxu0 0
        %731 = vmatpush.bf16.xpose.msra.mxu0 0
        %732 = vmatpush.bf16.xpose.msra.mxu0 0
        %733 = vmatpush.bf16.xpose.msra.mxu0 0
        %734 = vmatpush.bf16.xpose.msra.mxu0 0
        %735 = vmatpush.bf16.xpose.msra.mxu0 %v726
        %736 = vmatmul.bf16.gmra.mxu0 %v723
        %v737 = vpop.f32.mrf.mxu0
        %v738 = vadd.f32 0.0, %v737
        %v739 = vpop.f32.mrf.mxu0
        %740 = vdwg.mxu0
        %v742 = vunpack.c.l.b16 %v713
        %v743 = vpack.c.b16 %v742, %v742
        %744 = vrot.lane.b32.xlu0 %v743, 96
        %v745 = vpop.permute.xlu0 %744
        %v747 = vsel %vm721, %v699, 0
        %v750 = vsel %vm721, %v745, 0
        %752 = vmatpush.bf16.xpose.msra.mxu0 0
        %753 = vmatpush.bf16.xpose.msra.mxu0 0
        %754 = vmatpush.bf16.xpose.msra.mxu0 0
        %755 = vmatpush.bf16.xpose.msra.mxu0 0
        %756 = vmatpush.bf16.xpose.msra.mxu0 0
        %757 = vmatpush.bf16.xpose.msra.mxu0 0
        %758 = vmatpush.bf16.xpose.msra.mxu0 0
        %759 = vmatpush.bf16.xpose.msra.mxu0 %v750
        %760 = vmatmul.bf16.gmra.mxu0 %v747
        %v761 = vpop.f32.mrf.mxu0
        %v762 = vadd.f32 0.0, %v761
        %v763 = vpop.f32.mrf.mxu0
        %764 = vdwg.mxu0
        %v766 = vunpack.c.l.b16 %v714
        %v767 = vpack.c.b16 %v766, %v766
        %768 = vrot.lane.b32.xlu0 %v767, 96
        %v769 = vpop.permute.xlu0 %768
        %v771 = vsel %vm721, %v700, 0
        %v774 = vsel %vm721, %v769, 0
        %776 = vmatpush.bf16.xpose.msra.mxu0 0
        %777 = vmatpush.bf16.xpose.msra.mxu0 0
        %778 = vmatpush.bf16.xpose.msra.mxu0 0
        %779 = vmatpush.bf16.xpose.msra.mxu0 0
        %780 = vmatpush.bf16.xpose.msra.mxu0 0
        %781 = vmatpush.bf16.xpose.msra.mxu0 0
        %782 = vmatpush.bf16.xpose.msra.mxu0 0
        %783 = vmatpush.bf16.xpose.msra.mxu0 %v774
        %784 = vmatmul.bf16.gmra.mxu0 %v771
        %v785 = vpop.f32.mrf.mxu0
        %v786 = vadd.f32 0.0, %v785
        %v787 = vpop.f32.mrf.mxu0
        %788 = vdwg.mxu0
        %v790 = vunpack.c.l.b16 %v715
        %v791 = vpack.c.b16 %v790, %v790
        %792 = vrot.lane.b32.xlu0 %v791, 96
        %v793 = vpop.permute.xlu0 %792
        %v795 = vsel %vm721, %v701, 0
        %v798 = vsel %vm721, %v793, 0
        %800 = vmatpush.bf16.xpose.msra.mxu0 0
        %801 = vmatpush.bf16.xpose.msra.mxu0 0
        %802 = vmatpush.bf16.xpose.msra.mxu0 0
        %803 = vmatpush.bf16.xpose.msra.mxu0 0
        %804 = vmatpush.bf16.xpose.msra.mxu0 0
        %805 = vmatpush.bf16.xpose.msra.mxu0 0
        %806 = vmatpush.bf16.xpose.msra.mxu0 0
        %807 = vmatpush.bf16.xpose.msra.mxu0 %v798
        %808 = vmatmul.bf16.gmra.mxu0 %v795
        %v809 = vpop.f32.mrf.mxu0
        %v810 = vadd.f32 0.0, %v809
        %v811 = vpop.f32.mrf.mxu0
        %812 = vdwg.mxu0
        %v813 = vsel %vm721, %v738, -inf
        %814 = vmax.xlane.f32.xlu0 %v813
        %v815 = vpop.xlane.xlu0 %814
        %v816 = vsel %vm721, %v762, -inf
        %817 = vmax.xlane.f32.xlu0 %v816
        %v818 = vpop.xlane.xlu0 %817
        %v819 = vsel %vm721, %v786, -inf
        %820 = vmax.xlane.f32.xlu0 %v819
        %v821 = vpop.xlane.xlu0 %820
        %v822 = vsel %vm721, %v810, -inf
        %823 = vmax.xlane.f32.xlu0 %v822
        %v824 = vpop.xlane.xlu0 %823
        %v825 = vsub.f32 %v738, %v815
        %v826 = vsub.f32 %v762, %v818
        %v827 = vsub.f32 %v786, %v821
        %v828 = vsub.f32 %v810, %v824
        %v829 = vmul.f32 %v825, 1.442695
        %v830 = vpow.pop %v829
        %v831 = vmul.f32 %v826, 1.442695
        %v832 = vpow.pop %v831
        %v833 = vmul.f32 %v827, 1.442695
        %v834 = vpow.pop %v833
        %v835 = vmul.f32 %v828, 1.442695
        %v836 = vpow.pop %v835
        %v837 = vsel %vm721, %v830, 0.0
        %838 = vadd.xlane.f32.xlu0 %v837
        %v839 = vpop.xlane.xlu0 %838
        %v840 = vsel %vm721, %v832, 0.0
        %841 = vadd.xlane.f32.xlu0 %v840
        %v842 = vpop.xlane.xlu0 %841
        %v843 = vsel %vm721, %v834, 0.0
        %844 = vadd.xlane.f32.xlu0 %v843
        %v845 = vpop.xlane.xlu0 %844
        %v846 = vsel %vm721, %v836, 0.0
        %847 = vadd.xlane.f32.xlu0 %v846
        %v848 = vpop.xlane.xlu0 %847
        %v849 = vrcp.pop %v839
        %v850 = vrcp.pop %v842
        %v851 = vrcp.pop %v845
        %v852 = vrcp.pop %v848
        %v853 = vmul.f32 %v830, %v849
        %v854 = vmul.f32 %v832, %v850
        %v855 = vmul.f32 %v834, %v851
        %v856 = vmul.f32 %v836, %v852
        %v857 = vpack.c.bf16 %v853, %v853
        %v858 = vpack.c.bf16 %v854, %v854
        %v859 = vpack.c.bf16 %v855, %v855
        %v860 = vpack.c.bf16 %v856, %v856
        %861 = vrot.lane.b32.xlu0 %v718, 64
        %v862 = vpop.permute.xlu0 %861
        %v864 = vsel %vm721, %v857, 0
        %vm866 = vcmask 1043456
        %v868 = vsel %vm866, %v862, 0
        %870 = vmatpush.bf16.msra.mxu0 0
        %871 = vmatpush.bf16.msra.mxu0 0
        %872 = vmatpush.bf16.msra.mxu0 0
        %873 = vmatpush.bf16.msra.mxu0 0
        %874 = vmatpush.bf16.msra.mxu0 0
        %875 = vmatpush.bf16.msra.mxu0 0
        %876 = vmatpush.bf16.msra.mxu0 0
        %877 = vmatpush.bf16.msra.mxu0 %v868
        %878 = vmatmul.bf16.gmra.mxu0 %v864
        %v879 = vpop.f32.mrf.mxu0
        %v880 = vadd.f32 0.0, %v879
        %v881 = vpop.f32.mrf.mxu0
        %882 = vdwg.mxu0
        %883 = vrot.lane.b32.xlu0 %v743, 64
        %v884 = vpop.permute.xlu0 %883
        %v886 = vsel %vm721, %v858, 0
        %v889 = vsel %vm866, %v884, 0
        %891 = vmatpush.bf16.msra.mxu0 0
        %892 = vmatpush.bf16.msra.mxu0 0
        %893 = vmatpush.bf16.msra.mxu0 0
        %894 = vmatpush.bf16.msra.mxu0 0
        %895 = vmatpush.bf16.msra.mxu0 0
        %896 = vmatpush.bf16.msra.mxu0 0
        %897 = vmatpush.bf16.msra.mxu0 0
        %898 = vmatpush.bf16.msra.mxu0 %v889
        %899 = vmatmul.bf16.gmra.mxu0 %v886
        %v900 = vpop.f32.mrf.mxu0
        %v901 = vadd.f32 0.0, %v900
        %v902 = vpop.f32.mrf.mxu0
        %903 = vdwg.mxu0
        %904 = vrot.lane.b32.xlu0 %v767, 64
        %v905 = vpop.permute.xlu0 %904
        %v907 = vsel %vm721, %v859, 0
        %v910 = vsel %vm866, %v905, 0
        %912 = vmatpush.bf16.msra.mxu0 0
        %913 = vmatpush.bf16.msra.mxu0 0
        %914 = vmatpush.bf16.msra.mxu0 0
        %915 = vmatpush.bf16.msra.mxu0 0
        %916 = vmatpush.bf16.msra.mxu0 0
        %917 = vmatpush.bf16.msra.mxu0 0
        %918 = vmatpush.bf16.msra.mxu0 0
        %919 = vmatpush.bf16.msra.mxu0 %v910
        %920 = vmatmul.bf16.gmra.mxu0 %v907
        %v921 = vpop.f32.mrf.mxu0
        %v922 = vadd.f32 0.0, %v921
        %v923 = vpop.f32.mrf.mxu0
        %924 = vdwg.mxu0
        %925 = vrot.lane.b32.xlu0 %v791, 64
        %v926 = vpop.permute.xlu0 %925
        %v928 = vsel %vm721, %v860, 0
        %v931 = vsel %vm866, %v926, 0
        %933 = vmatpush.bf16.msra.mxu0 0
        %934 = vmatpush.bf16.msra.mxu0 0
        %935 = vmatpush.bf16.msra.mxu0 0
        %936 = vmatpush.bf16.msra.mxu0 0
        %937 = vmatpush.bf16.msra.mxu0 0
        %938 = vmatpush.bf16.msra.mxu0 0
        %939 = vmatpush.bf16.msra.mxu0 0
        %940 = vmatpush.bf16.msra.mxu0 %v931
        %941 = vmatmul.bf16.gmra.mxu0 %v928
        %v942 = vpop.f32.mrf.mxu0
        %v943 = vadd.f32 0.0, %v942
        %v944 = vpop.f32.mrf.mxu0
        %945 = vdwg.mxu0
        %v946 = vpack.c.bf16 %v880, %v880
        %v947 = vld [vmem:[%s608] sm:$0xf]
        %v948 = vpack.c.bf16 %v901, %v901
        %s949 = scalar_lea.vmem %s608, 4
        %v950 = vld [vmem:[%s949] sm:$0xf]
        %v952 = vsel %vm721, %v948, 0
        %v955 = vsel %vm866, %v950, 0
        %957 = vmatpush.bf16.msra.mxu0 0
        %958 = vmatpush.bf16.msra.mxu0 0
        %959 = vmatpush.bf16.msra.mxu0 0
        %960 = vmatpush.bf16.msra.mxu0 0
        %961 = vmatpush.bf16.msra.mxu0 0
        %962 = vmatpush.bf16.msra.mxu0 0
        %963 = vmatpush.bf16.msra.mxu0 0
        %964 = vmatpush.bf16.msra.mxu0 %v955
        %965 = vmatmul.bf16.gmra.mxu0 %v952
        %v966 = vpop.f32.mrf.mxu0
        %v967 = vadd.f32 0.0, %v966
        %v968 = vpop.f32.mrf.mxu0
        %969 = vdwg.mxu0
        %v971 = vsel %vm721, %v946, 0
        %v974 = vsel %vm866, %v947, 0
        %976 = vmatpush.bf16.msra.mxu0 0
        %977 = vmatpush.bf16.msra.mxu0 0
        %978 = vmatpush.bf16.msra.mxu0 0
        %979 = vmatpush.bf16.msra.mxu0 0
        %980 = vmatpush.bf16.msra.mxu0 0
        %981 = vmatpush.bf16.msra.mxu0 0
        %982 = vmatpush.bf16.msra.mxu0 0
        %983 = vmatpush.bf16.msra.mxu0 %v974
        %984 = vmatmul.bf16.gmra.mxu0 %v971
        %v985 = vpop.f32.mrf.mxu0
        %v986 = vadd.f32 %v967, %v985
        %v987 = vpop.f32.mrf.mxu0
        %988 = vdwg.mxu0
        %v989 = vpack.c.bf16 %v922, %v922
        %s990 = scalar_lea.vmem %s608, 8
        %v991 = vld [vmem:[%s990] sm:$0xf]
        %v993 = vsel %vm721, %v989, 0
        %v996 = vsel %vm866, %v991, 0
        %998 = vmatpush.bf16.msra.mxu0 0
        %999 = vmatpush.bf16.msra.mxu0 0
        %1000 = vmatpush.bf16.msra.mxu0 0
        %1001 = vmatpush.bf16.msra.mxu0 0
        %1002 = vmatpush.bf16.msra.mxu0 0
        %1003 = vmatpush.bf16.msra.mxu0 0
        %1004 = vmatpush.bf16.msra.mxu0 0
        %1005 = vmatpush.bf16.msra.mxu0 %v996
        %1006 = vmatmul.bf16.gmra.mxu0 %v993
        %v1007 = vpop.f32.mrf.mxu0
        %v1008 = vadd.f32 0.0, %v1007
        %v1009 = vpop.f32.mrf.mxu0
        %1010 = vdwg.mxu0
        %v1011 = vadd.f32 %v986, %v1008
        %v1012 = vpack.c.bf16 %v943, %v943
        %s1013 = scalar_lea.vmem %s608, 12
        %v1014 = vld [vmem:[%s1013] sm:$0xf]
        %v1016 = vsel %vm721, %v1012, 0
        %v1019 = vsel %vm866, %v1014, 0
        %1021 = vmatpush.bf16.msra.mxu0 0
        %1022 = vmatpush.bf16.msra.mxu0 0
        %1023 = vmatpush.bf16.msra.mxu0 0
        %1024 = vmatpush.bf16.msra.mxu0 0
        %1025 = vmatpush.bf16.msra.mxu0 0
        %1026 = vmatpush.bf16.msra.mxu0 0
        %1027 = vmatpush.bf16.msra.mxu0 0
        %1028 = vmatpush.bf16.msra.mxu0 %v1019
        %1029 = vmatmul.bf16.gmra.mxu0 %v1016
        %v1030 = vpop.f32.mrf.mxu0
        %v1031 = vadd.f32 0.0, %v1030
        %v1032 = vpop.f32.mrf.mxu0
        %1033 = vdwg.mxu0
        %v1034 = vadd.f32 %v1011, %v1031
        %v1035 = vld [vmem:[%s611] sm:$0x1]
        %v1037 = vperm.slane %v1035, 0
        %v1039 = vadd.f32 %v1034, %v1037
        %v1040 = vadd.f32 %v1039, %v648
        %v1041 = vld [vmem:[%s614] sm:$0x1]
        %v1042 = vld [vmem:[%s617] sm:$0x1]
        %v1043 = vsel %vm670, %v1040, 0.0
        %1044 = vadd.xlane.f32.xlu0 %v1043
        %v1045 = vpop.xlane.xlu0 %1044
        %v1046 = vrcp.pop 32.0
        %v1047 = vmul.f32 32.0, %v1046
        %v1048 = vsub.f32 1.0, %v1047
        %v1049 = vmul.f32 %v1046, %v1048
        %v1050 = vadd.f32 %v1046, %v1049
        %vm1051 = vweird.f32 %v1046
        %v1052 = vsel %vm1051, %v1046, %v1050
        %v1053 = vmul.f32 %v1045, %v1052
        %v1054 = vsub.f32 %v1040, %v1053
        %v1055 = vmul.f32 %v1054, %v1054
        %v1056 = vsel %vm670, %v1055, 0.0
        %1057 = vadd.xlane.f32.xlu0 %v1056
        %v1058 = vpop.xlane.xlu0 %1057
        %v1059 = vmul.f32 %v1058, %v1052
        %v1060 = vadd.f32 %v1059, 1e-05
        %v1061 = vrsqrt.pop %v1060
        %v1062 = vmul.f32 %v1061, %v1060
        %v1063 = vmul.f32 %v1062, %v1061
        %v1064 = vmul.f32 0.5, %v1063
        %v1065 = vsub.f32 1.5, %v1064
        %v1066 = vmul.f32 %v1061, %v1065
        %vm1067 = vweird.f32 %v1060
        %vm1068 = vweird.f32 %v1061
        %vm1069 = vmor %vm1067, %vm1068
        %v1070 = vsel %vm1069, %v1061, %v1066
        %v1071 = vmul.f32 %v1054, %v1070
        %v1073 = vperm.slane %v1041, 0
        %v1075 = vmul.f32 %v1071, %v1073
        %v1077 = vperm.slane %v1042, 0
        %v1079 = vadd.f32 %v1075, %v1077
        %v1080 = vpack.c.bf16 %v1079, %v1079
        %v1081 = vld [vmem:[%s622] sm:$0xf]
        %v1082 = vld [vmem:[%s622 + $0x4] sm:$0xf]
        %v1083 = vld [vmem:[%s622 + $0x8] sm:$0xf]
        %v1084 = vld [vmem:[%s622 + $0xc] sm:$0xf]
        %v1085 = vld [vmem:[%s625] sm:$0x1]
        %v1087 = vperm.slane %v1085, 0
        %v1093 = vunpack.c.l.b16 %v1081
        %v1094 = vunpack.c.l.b16 %v1082
        %v1095 = vunpack.c.l.b16 %v1083
        %v1096 = vunpack.c.l.b16 %v1084
        %v1097 = vpack.c.b16 %v1094, %v1093
        %v1098 = vpack.c.b16 %v1096, %v1095
        %v1102 = vsel %vm670, %v1080, 0
        %1104 = vmatpush.bf16.msra.mxu0 0
        %1105 = vmatpush.bf16.msra.mxu0 0
        %1106 = vmatpush.bf16.msra.mxu0 0
        %1107 = vmatpush.bf16.msra.mxu0 0
        %1108 = vmatpush.bf16.msra.mxu0 0
        %1109 = vmatpush.bf16.msra.mxu0 0
        %1110 = vmatpush.bf16.msra.mxu0 %v1098
        %1111 = vmatpush.bf16.msra.mxu0 %v1097
        %1112 = vmatmul.bf16.gmra.mxu0 %v1102
        %v1113 = vpop.f32.mrf.mxu0
        %v1114 = vadd.f32 %v1087, %v1113
        %v1115 = vpop.f32.mrf.mxu0
        %1116 = vdwg.mxu0
        %v1117 = vmul.f32 %v1114, %v1114
        %v1118 = vmul.f32 %v1114, %v1117
        %v1119 = vmul.f32 %v1118, 0.044715
        %v1120 = vadd.f32 %v1114, %v1119
        %v1121 = vmul.f32 %v1120, 0.7978846
        %v1122 = vtanh.pop %v1121
        %v1123 = vadd.f32 %v1122, 1.0
        %v1124 = vmul.f32 %v1123, 0.5
        %v1125 = vmul.f32 %v1114, %v1124
        %v1126 = vpack.c.bf16 %v1125, %v1125
        %v1127 = vld [vmem:[%s630] sm:$0xf]
        %v1128 = vld [vmem:[%s630 + $0x4] sm:$0xf]
        %v1129 = vld [vmem:[%s630 + $0x8] sm:$0xf]
        %v1130 = vld [vmem:[%s630 + $0xc] sm:$0xf]
        %v1131 = vld [vmem:[%s630 + $0x10] sm:$0xf]
        %v1132 = vld [vmem:[%s630 + $0x14] sm:$0xf]
        %v1133 = vld [vmem:[%s630 + $0x18] sm:$0xf]
        %v1134 = vld [vmem:[%s630 + $0x1c] sm:$0xf]
        %v1135 = vld [vmem:[%s630 + $0x20] sm:$0xf]
        %v1136 = vld [vmem:[%s630 + $0x24] sm:$0xf]
        %v1137 = vld [vmem:[%s630 + $0x28] sm:$0xf]
        %v1138 = vld [vmem:[%s630 + $0x2c] sm:$0xf]
        %v1139 = vld [vmem:[%s630 + $0x30] sm:$0xf]
        %v1140 = vld [vmem:[%s630 + $0x34] sm:$0xf]
        %v1141 = vld [vmem:[%s630 + $0x38] sm:$0xf]
        %v1142 = vld [vmem:[%s630 + $0x3c] sm:$0xf]
        %v1143 = vld [vmem:[%s633] sm:$0x1]
        %v1145 = vperm.slane %v1143, 0
        %v1163 = vunpack.c.l.b16 %v1127
        %v1164 = vunpack.c.l.b16 %v1128
        %v1165 = vunpack.c.l.b16 %v1129
        %v1166 = vunpack.c.l.b16 %v1130
        %v1167 = vunpack.c.l.b16 %v1131
        %v1168 = vunpack.c.l.b16 %v1132
        %v1169 = vunpack.c.l.b16 %v1133
        %v1170 = vunpack.c.l.b16 %v1134
        %v1171 = vunpack.c.l.b16 %v1135
        %v1172 = vunpack.c.l.b16 %v1136
        %v1173 = vunpack.c.l.b16 %v1137
        %v1174 = vunpack.c.l.b16 %v1138
        %v1175 = vunpack.c.l.b16 %v1139
        %v1176 = vunpack.c.l.b16 %v1140
        %v1177 = vunpack.c.l.b16 %v1141
        %v1178 = vunpack.c.l.b16 %v1142
        %v1179 = vpack.c.b16 %v1164, %v1163
        %v1180 = vpack.c.b16 %v1166, %v1165
        %v1181 = vpack.c.b16 %v1168, %v1167
        %v1182 = vpack.c.b16 %v1170, %v1169
        %v1183 = vpack.c.b16 %v1172, %v1171
        %v1184 = vpack.c.b16 %v1174, %v1173
        %v1185 = vpack.c.b16 %v1176, %v1175
        %v1186 = vpack.c.b16 %v1178, %v1177
        %1195 = vmatpush.bf16.msra.mxu0 %v1186
        %1196 = vmatpush.bf16.msra.mxu0 %v1185
        %1197 = vmatpush.bf16.msra.mxu0 %v1184
        %1198 = vmatpush.bf16.msra.mxu0 %v1183
        %1199 = vmatpush.bf16.msra.mxu0 %v1182
        %1200 = vmatpush.bf16.msra.mxu0 %v1181
        %1201 = vmatpush.bf16.msra.mxu0 %v1180
        %1202 = vmatpush.bf16.msra.mxu0 %v1179
        %1203 = vmatmul.bf16.gmra.mxu0 %v1126
        %v1204 = vpop.f32.mrf.mxu0
        %v1205 = vadd.f32 %v1145, %v1204
        %v1206 = vpop.f32.mrf.mxu0
        %1207 = vdwg.mxu0
        %v1208 = vadd.f32 %v1205, %v1079
        %v1209 = vld [vmem:[%s636] sm:$0x1]
        %v1210 = vld [vmem:[%s639] sm:$0x1]
        %v1211 = vsel %vm670, %v1208, 0.0
        %1212 = vadd.xlane.f32.xlu0 %v1211
        %v1213 = vpop.xlane.xlu0 %1212
        %v1214 = vmul.f32 %v1213, %v1052
        %v1215 = vsub.f32 %v1208, %v1214
        %v1216 = vmul.f32 %v1215, %v1215
        %v1217 = vsel %vm670, %v1216, 0.0
        %1218 = vadd.xlane.f32.xlu0 %v1217
        %v1219 = vpop.xlane.xlu0 %1218
        %v1220 = vmul.f32 %v1219, %v1052
        %v1221 = vadd.f32 %v1220, 1e-05
        %v1222 = vrsqrt.pop %v1221
        %v1223 = vmul.f32 %v1222, %v1221
        %v1224 = vmul.f32 %v1223, %v1222
        %v1225 = vmul.f32 0.5, %v1224
        %v1226 = vsub.f32 1.5, %v1225
        %v1227 = vmul.f32 %v1222, %v1226
        %vm1228 = vweird.f32 %v1221
        %vm1229 = vweird.f32 %v1222
        %vm1230 = vmor %vm1228, %vm1229
        %v1231 = vsel %vm1230, %v1222, %v1227
        %v1232 = vmul.f32 %v1215, %v1231
        %v1234 = vperm.slane %v1209, 0
        %v1236 = vmul.f32 %v1232, %v1234
        %v1238 = vperm.slane %v1210, 0
        %v1240 = vadd.f32 %v1236, %v1238
        %1241 = vst.msk [vmem:[#allocation2] sm:$0xff] %vm670, %v1240
        %p1242 = scmp.eq.s32.totalorder %s32, 1
        // Predicated region
        $region77: #{tpu_custom_call.1} parent=71 // pred_check
          %p1243 = pneg %p1242
        $region78: #{tpu_custom_call.1} parent=71 // pred_check_branch
          %1245 = sbr.rel (%p1243) target = $region80
        $region79: #{tpu_custom_call.1} parent=71 // pred_region
          %1246 = vst.msk [vmem:[%s591] sm:$0xff] %vm670, %v1240
        $region80: #{tpu_custom_call.1} parent=71 // pred_fallthru
          _
        %s1247 = sand.u32 %s385, 1
        %s1248 = scalar_lea.sflag [#allocation4], %s1247
        %s1249 = sand.u32 %s385, 1
        %s1250 = smul.addr %s1249, 8
        %s1251 = scalar_lea.vmem [#allocation3], %s1250
        // Predicated region
        $region81: #{tpu_custom_call.1} parent=71 // pred_check
          %p1252 = pneg %p395
        $region82: #{tpu_custom_call.1} parent=71 // pred_check_branch
          %1254 = sbr.rel (%p1252) target = $region84
        $region83: #{tpu_custom_call.1} parent=71 // pred_region
          %1256 = vsyncadd %s1248, 0
          %s1257 = smul.addr %s31, 8
          %s1258 = scalar_lea.hbm %s13, %s1257
          %s1260 = sshll.u32 %s1251, 4
          %s1261 = int_to_ptr.vmem [resolvable:$true] %s1260
          %s1262 = sshll.u32 %s1258, 4
          %s1263 = int_to_ptr.hbm [resolvable:$true] %s1262
          %1265 = dma.vmem_to_hbm [thread:$0]  %s1261, 128, %s1263, %s1248
        $region84: #{tpu_custom_call.1} parent=71 // pred_fallthru
          _
      $region72: #{tpu_custom_call.1} parent=5 // pred_fallthru
        _
      %p1266 = scmp.le.s32.totalorder 2, %s22
      // Predicated region
      $region85: #{tpu_custom_call.1} parent=5 // pred_check
        %p1267 = pneg %p1266
      $region86: #{tpu_custom_call.1} parent=5 // pred_check_branch
        %1269 = sbr.rel (%p1267) target = $region88
      $region87: #{tpu_custom_call.1} parent=5 // pred_region
        %s1270 = ssub.s32 %s22, 2
        // Predicated region
        $region89: #{tpu_custom_call.1} parent=87 // pred_check
          %p1271 = pneg %p401
        $region90: #{tpu_custom_call.1} parent=87 // pred_check_branch
          %1273 = sbr.rel (%p1271) target = $region92
        $region91: #{tpu_custom_call.1} parent=87 // pred_region
          %s1274 = sand.u32 %s386, 1
          %s1275 = scalar_lea.sflag [#allocation4], %s1274
          %s1276 = sand.u32 %s386, 1
          %s1277 = smul.addr %s1276, 8
          %s1278 = scalar_lea.vmem [#allocation3], %s1277
          %1280 = dma.done %s1275, 128
        $region92: #{tpu_custom_call.1} parent=87 // pred_fallthru
          _
      $region88: #{tpu_custom_call.1} parent=5 // pred_fallthru
        _
    $region6: #{tpu_custom_call.1} parent=1 // loop_footer
      %s26 = sadd.s32 1, %s22
    $region7: #{tpu_custom_call.1} parent=1 // loop_footer_branch
      %21 = sbr.rel target = $region3
    $region8: #{tpu_custom_call.1} parent=1 // loop_exit
      _
    %1281 = vsyncpa [#allocation4], 1
    %s1282 = scalar_lea.sflag [#allocation4], 1
    %1283 = vsyncpa %s1282, 1

</llo_original>
